<compile_context>
chip_gen: v7x
topology: tpu7x:2x2x1
jax: 0.10.0
libtpu: 0.0.40
codegen_flags: <defaults>
</compile_context>

<pallas_src>
import math

import jax
import jax.numpy as jnp
from jax.experimental import pallas as pl
from jax.experimental.pallas import tpu as pltpu


# nn.LeakyReLU(True) -> negative_slope = float(True) = 1.0 (identity).
_LEAKY_NEG_SLOPE = 1.0


def _mm(a, b):
    """a @ b on the MXU, f32 accumulation, default (single-pass) precision."""
    return jnp.dot(a, b, preferred_element_type=jnp.float32)


def _mm_nt(a, b):
    """a @ b.T without materializing an in-kernel transpose."""
    return jax.lax.dot_general(
        a, b, (((1,), (1,)), ((), ())),
        preferred_element_type=jnp.float32)


def _pick_batch_tile(B, S, target_rows=256):
    """Largest divisor Bt of B with Bt*S <= target_rows, keeping >= 2 grid
    steps when B >= 2 so both v7x TensorCores get work."""
    bt = max(1, min(B, target_rows // max(S, 1)))
    while B % bt:
        bt -= 1
    if B >= 2 and B // bt < 2:
        bt = max(d for d in range(1, B) if B % d == 0 and B // d >= 2)
    return bt


def _make_kernel(S, H, Dh, Bt):
    D = H * Dh
    scale = 1.0 / math.sqrt(Dh)

    def kernel(x_ref,        # (Bt*S, D) f32 activation slab
               wqkv_ref,     # (D, 3D)  bf16 fused in-proj
               bqkv_ref,     # (1, 3D)  f32
               wo_ref,       # (D, D)   bf16 out-proj (pre-transposed)
               w1_ref,       # (D, F)   bf16 linear1 (pre-transposed)
               w2_ref,       # (F, D)   bf16 linear2 (pre-transposed)
               brest_ref,    # (1, 2D+F) f32: bo | b1 | b2
               o_ref,        # (Bt*S, D)
               ctx_ref):     # VMEM scratch (Bt*S, D) f32: concat'd head outputs
        F = w1_ref.shape[1]

        x = x_ref[...]                                   # f32, exact residual path
        x_bf = x.astype(jnp.bfloat16)

        # ---- Fused QKV projection: one wide MXU matmul -------------------
        qkv = _mm(x_bf, wqkv_ref[...]) + bqkv_ref[...]   # (Bt*S, 3D) f32

        brest = brest_ref[...]
        bo = brest[:, 0:D]
        b1 = brest[:, D:D + F]
        b2 = brest[:, D + F:D + F + D]

        # ---- Attention: tiny per-(batch, head) (S,S) matmuls, static slices
        for b in range(Bt):
            rows = slice(b * S, (b + 1) * S)
            qkv_b = qkv[rows, :]
            for h in range(H):
                q = qkv_b[:, h * Dh:(h + 1) * Dh] * scale          # (S, Dh)
                k = qkv_b[:, D + h * Dh:D + (h + 1) * Dh]          # (S, Dh)
                v = qkv_b[:, 2 * D + h * Dh:2 * D + (h + 1) * Dh]  # (S, Dh)

                s = _mm_nt(q, k)                                   # (S, S)
                s = s - jnp.max(s, axis=-1, keepdims=True)
                p = jnp.exp(s)
                p = p * pl.reciprocal(jnp.sum(p, axis=-1, keepdims=True),
                                      approx=True)
                ctx_ref[rows, h * Dh:(h + 1) * Dh] = _mm(p, v)     # (S, Dh)

        # ---- Fused output projection: one (Bt*S, D) @ (D, D) matmul ------
        attn = _mm(ctx_ref[...].astype(jnp.bfloat16), wo_ref[...]) + bo
        x1 = x + attn                        # residual 1 (dropout1 identity)

        # ---- Feed-forward on the full slab --------------------------------
        h1 = _mm(x1.astype(jnp.bfloat16), w1_ref[...]) + b1        # (Bt*S, F)
        if _LEAKY_NEG_SLOPE != 1.0:          # LeakyReLU(True): slope 1 -> identity
            h1 = jnp.where(h1 >= 0, h1, _LEAKY_NEG_SLOPE * h1)
        ffn = _mm(h1.astype(jnp.bfloat16), w2_ref[...]) + b2       # (Bt*S, D)

        o_ref[...] = (x1 + ffn).astype(o_ref.dtype)  # residual 2 (dropout2 identity)

    return kernel


def transformer_encoder_layer(src, in_proj_w, in_proj_b, out_proj_w, out_proj_b,
                              w1, b1, w2, b2, *, nhead):
    """src: (S, B, D) float32, seq-first like the PyTorch module. Returns (S, B, D)."""
    S, B, D = src.shape
    H = nhead
    assert D % H == 0, "d_model must be divisible by nhead"
    Dh = D // H
    F = w1.shape[0]
    f32, bf16 = jnp.float32, jnp.bfloat16

    # ---- Wrapper-side weight plumbing (static, outside the kernel) --------
    # PyTorch Linear is y = x @ W.T + b with W of shape (out, in).
    wqkv = in_proj_w.T.astype(bf16)                       # (D, 3D): Q | K | V, head-major
    bqkv = in_proj_b.reshape(1, 3 * D).astype(f32)
    wo = out_proj_w.T.astype(bf16)                        # (D, D)
    w1t = w1.T.astype(bf16)                               # (D, F)
    w2t = w2.T.astype(bf16)                               # (F, D)
    brest = jnp.concatenate(
        [out_proj_b.reshape(1, D), b1.reshape(1, F), b2.reshape(1, D)],
        axis=1).astype(f32)                               # (1, 2D+F)

    # TODO(synk): avoid these activation transposes by taking batch-major input.
    x2d = jnp.transpose(src, (1, 0, 2)).reshape(B * S, D).astype(f32)  # (B*S, D)

    Bt = _pick_batch_tile(B, S)
    R = Bt * S
    grid = (B // Bt,)

    kernel = _make_kernel(S, H, Dh, Bt)

    def _full(shape):
        return pl.BlockSpec(shape, lambda i: (0,) * len(shape))

    out2d = pl.pallas_call(
        kernel,
        out_shape=jax.ShapeDtypeStruct((B * S, D), src.dtype),
        grid_spec=pltpu.PrefetchScalarGridSpec(
            num_scalar_prefetch=0,
            grid=grid,
            in_specs=[
                pl.BlockSpec((R, D), lambda i: (i, 0)),   # x slab (rows = Bt*S)
                _full((D, 3 * D)),                        # wqkv
                _full((1, 3 * D)),                        # bqkv
                _full((D, D)),                            # wo
                _full((D, F)),                            # w1.T
                _full((F, D)),                            # w2.T
                _full((1, 2 * D + F)),                    # bo | b1 | b2
            ],
            out_specs=pl.BlockSpec((R, D), lambda i: (i, 0)),
            scratch_shapes=[pltpu.VMEM((R, D), jnp.float32)],  # concat'd head ctx
        ),
        compiler_params=pltpu.CompilerParams(
            dimension_semantics=("parallel",)),
    )(x2d, wqkv, bqkv, wo, w1t, w2t, brest)

    return out2d.reshape(B, S, D).transpose(1, 0, 2)              # (S, B, D)


def _reference(src, in_proj_w, in_proj_b, out_proj_w, out_proj_b,
               w1, b1, w2, b2, nhead):
    """Plain-JAX f32 reference mirroring the PyTorch module (dropout=0)."""
    S, B, D = src.shape
    H = nhead
    Dh = D // H
    hi = jax.lax.Precision.HIGHEST

    qkv = jnp.einsum('sbd,ed->sbe', src, in_proj_w, precision=hi) + in_proj_b
    q, k, v = qkv[..., :D], qkv[..., D:2 * D], qkv[..., 2 * D:]

    def split(t):  # (S, B, D) -> (B, H, S, Dh)
        return t.reshape(S, B, H, Dh).transpose(1, 2, 0, 3)

    qh, kh, vh = split(q), split(k), split(v)
    scores = jnp.einsum('bhqe,bhke->bhqk', qh, kh, precision=hi) / math.sqrt(Dh)
    p = jax.nn.softmax(scores, axis=-1)
    ctx = jnp.einsum('bhqk,bhke->bhqe', p, vh, precision=hi)       # (B,H,S,Dh)
    ctx = ctx.transpose(2, 0, 1, 3).reshape(S, B, D)
    attn = jnp.einsum('sbd,ed->sbe', ctx, out_proj_w, precision=hi) + out_proj_b

    x1 = src + attn
    h1 = jnp.einsum('sbd,fd->sbf', x1, w1, precision=hi) + b1
    if _LEAKY_NEG_SLOPE != 1.0:
        h1 = jnp.where(h1 >= 0, h1, _LEAKY_NEG_SLOPE * h1)
    ffn = jnp.einsum('sbf,df->sbd', h1, w2, precision=hi) + b2
    return x1 + ffn


if __name__ == "__main__":
    key = jax.random.PRNGKey(0)
    S, B, D, H, F = 8, 2, 32, 4, 16   # seq, batch, d_model, nhead, dim_feedforward

    ks = jax.random.split(key, 9)
    x = jax.random.normal(ks[0], (S, B, D), jnp.float32)
    in_proj_w = jax.random.normal(ks[1], (3 * D, D), jnp.float32) / math.sqrt(D)
    in_proj_b = jax.random.normal(ks[2], (3 * D,), jnp.float32) * 0.1
    out_proj_w = jax.random.normal(ks[3], (D, D), jnp.float32) / math.sqrt(D)
    out_proj_b = jax.random.normal(ks[4], (D,), jnp.float32) * 0.1
    w1 = jax.random.normal(ks[5], (F, D), jnp.float32) / math.sqrt(D)
    b1 = jax.random.normal(ks[6], (F,), jnp.float32) * 0.1
    w2 = jax.random.normal(ks[7], (D, F), jnp.float32) / math.sqrt(F)
    b2 = jax.random.normal(ks[8], (D,), jnp.float32) * 0.1

    out = transformer_encoder_layer(
        x, in_proj_w, in_proj_b, out_proj_w, out_proj_b, w1, b1, w2, b2, nhead=H)
    out = jax.block_until_ready(out)

    ref = _reference(x, in_proj_w, in_proj_b, out_proj_w, out_proj_b,
                     w1, b1, w2, b2, nhead=H)

    assert out.shape == (S, B, D)
    # Kernel uses bf16-in / f32-accumulate single-pass MXU matmuls, compared
    # against an f32 HIGHEST-precision reference: check max error against the
    # output scale.  Structural bugs produce errors on the order of `scale`.
    err = float(jnp.max(jnp.abs(out - ref)))
    scale = float(jnp.max(jnp.abs(ref)))
    assert err <= 3e-2 * scale + 1e-3, (err, scale)
    print("KERNEL_OK")
</pallas_src>

<mosaic_0001>
module attributes {stable_mosaic.version = 11 : i64} {
  func.func @kernel(%arg0: i32, %arg1: memref<8x32xf32, #tpu.memory_space<vmem>>, %arg2: memref<32x96xbf16, #tpu.memory_space<vmem>>, %arg3: memref<1x96xf32, #tpu.memory_space<vmem>>, %arg4: memref<32x32xbf16, #tpu.memory_space<vmem>>, %arg5: memref<32x16xbf16, #tpu.memory_space<vmem>>, %arg6: memref<16x32xbf16, #tpu.memory_space<vmem>>, %arg7: memref<1x80xf32, #tpu.memory_space<vmem>>, %arg8: memref<8x32xf32, #tpu.memory_space<vmem>>, %arg9: memref<8x32xf32, #tpu.memory_space<vmem>>) attributes {dimension_semantics = [#tpu.dimension_semantics<parallel>], iteration_bounds = array<i64: 2>, scalar_prefetch = 0 : i64, scratch_operands = 1 : i64, tpu.core_type = #tpu.core_type<tc>, window_params = [{transform_indices = @transform_0, window_bounds = array<i64: 8, 32>}, {pipeline_mode = #tpu.pipeline_mode<synchronous>, transform_indices = @transform_1, window_bounds = array<i64: 32, 96>}, {pipeline_mode = #tpu.pipeline_mode<synchronous>, transform_indices = @transform_2, window_bounds = array<i64: 1, 96>}, {pipeline_mode = #tpu.pipeline_mode<synchronous>, transform_indices = @transform_3, window_bounds = array<i64: 32, 32>}, {pipeline_mode = #tpu.pipeline_mode<synchronous>, transform_indices = @transform_4, window_bounds = array<i64: 32, 16>}, {pipeline_mode = #tpu.pipeline_mode<synchronous>, transform_indices = @transform_5, window_bounds = array<i64: 16, 32>}, {pipeline_mode = #tpu.pipeline_mode<synchronous>, transform_indices = @transform_6, window_bounds = array<i64: 1, 80>}, {transform_indices = @transform_7, window_bounds = array<i64: 8, 32>}]} {
    %c0 = arith.constant 0 : index
    %c0_0 = arith.constant 0 : index
    %0 = vector.load %arg1[%c0, %c0_0] : memref<8x32xf32, #tpu.memory_space<vmem>>, vector<8x32xf32>
    %1 = arith.truncf %0 : vector<8x32xf32> to vector<8x32xbf16>
    %c0_1 = arith.constant 0 : index
    %c0_2 = arith.constant 0 : index
    %2 = vector.load %arg2[%c0_1, %c0_2] : memref<32x96xbf16, #tpu.memory_space<vmem>>, vector<32x96xbf16>
    %cst = arith.constant dense<0.000000e+00> : vector<8x96xf32>
    %3 = tpu.matmul %1, %2, %cst {dimension_numbers = #tpu.dot_dimension_numbers<[1], [0], [0], [1], [0, 0, 1, 1], [], []>} : vector<8x32xbf16>, vector<32x96xbf16>, vector<8x96xf32> -> vector<8x96xf32>
    %c0_3 = arith.constant 0 : index
    %c0_4 = arith.constant 0 : index
    %4 = vector.load %arg3[%c0_3, %c0_4] : memref<1x96xf32, #tpu.memory_space<vmem>>, vector<1x96xf32>
    %5 = vector.broadcast %4 : vector<1x96xf32> to vector<8x96xf32>
    %6 = arith.addf %3, %5 : vector<8x96xf32>
    %c0_5 = arith.constant 0 : index
    %c0_6 = arith.constant 0 : index
    %7 = vector.load %arg7[%c0_5, %c0_6] : memref<1x80xf32, #tpu.memory_space<vmem>>, vector<1x80xf32>
    %8 = vector.extract_strided_slice %7 {offsets = [0, 0], sizes = [1, 32], strides = [1, 1]} : vector<1x80xf32> to vector<1x32xf32>
    %9 = vector.extract_strided_slice %7 {offsets = [0, 32], sizes = [1, 16], strides = [1, 1]} : vector<1x80xf32> to vector<1x16xf32>
    %10 = vector.extract_strided_slice %7 {offsets = [0, 48], sizes = [1, 32], strides = [1, 1]} : vector<1x80xf32> to vector<1x32xf32>
    %11 = vector.extract_strided_slice %6 {offsets = [0, 0], sizes = [8, 8], strides = [1, 1]} : vector<8x96xf32> to vector<8x8xf32>
    %cst_7 = arith.constant 0.353553385 : f32
    %12 = vector.broadcast %cst_7 : f32 to vector<8x8xf32>
    %13 = arith.mulf %11, %12 : vector<8x8xf32>
    %14 = vector.extract_strided_slice %6 {offsets = [0, 32], sizes = [8, 8], strides = [1, 1]} : vector<8x96xf32> to vector<8x8xf32>
    %15 = vector.extract_strided_slice %6 {offsets = [0, 64], sizes = [8, 8], strides = [1, 1]} : vector<8x96xf32> to vector<8x8xf32>
    %cst_8 = arith.constant dense<0.000000e+00> : vector<8x8xf32>
    %16 = tpu.matmul %13, %14, %cst_8 {dimension_numbers = #tpu.dot_dimension_numbers<[1], [1], [0], [0], [0, 0, 1, 0], [], []>} : vector<8x8xf32>, vector<8x8xf32>, vector<8x8xf32> -> vector<8x8xf32>
    %cst_9 = arith.constant dense<0xFF800000> : vector<8xf32>
    %17 = vector.multi_reduction <maximumf>, %16, %cst_9 [1] : vector<8x8xf32> to vector<8xf32>
    %18 = vector.shape_cast %17 : vector<8xf32> to vector<8x1xf32>
    %19 = vector.broadcast %18 : vector<8x1xf32> to vector<8x8xf32>
    %20 = arith.subf %16, %19 : vector<8x8xf32>
    %21 = math.exp %20 : vector<8x8xf32>
    %cst_10 = arith.constant dense<0.000000e+00> : vector<8xf32>
    %22 = vector.multi_reduction <add>, %21, %cst_10 [1] : vector<8x8xf32> to vector<8xf32>
    %23 = vector.shape_cast %22 : vector<8xf32> to vector<8x1xf32>
    %24 = tpu.reciprocal %23 {approx = true} : vector<8x1xf32> -> vector<8x1xf32>
    %25 = vector.broadcast %24 : vector<8x1xf32> to vector<8x8xf32>
    %26 = arith.mulf %21, %25 : vector<8x8xf32>
    %cst_11 = arith.constant dense<0.000000e+00> : vector<8x8xf32>
    %27 = tpu.matmul %26, %15, %cst_11 {dimension_numbers = #tpu.dot_dimension_numbers<[1], [0], [0], [1], [0, 0, 1, 1], [], []>} : vector<8x8xf32>, vector<8x8xf32>, vector<8x8xf32> -> vector<8x8xf32>
    %c0_12 = arith.constant 0 : index
    %c0_13 = arith.constant 0 : index
    %28 = vector.load %arg9[%c0_12, %c0_13] : memref<8x32xf32, #tpu.memory_space<vmem>>, vector<8x8xf32>
    tpu.vector_store %arg9[%c0_12, %c0_13], %27 {strides = array<i32>} : memref<8x32xf32, #tpu.memory_space<vmem>>, vector<8x8xf32>,
    %29 = vector.extract_strided_slice %6 {offsets = [0, 8], sizes = [8, 8], strides = [1, 1]} : vector<8x96xf32> to vector<8x8xf32>
    %cst_14 = arith.constant 0.353553385 : f32
    %30 = vector.broadcast %cst_14 : f32 to vector<8x8xf32>
    %31 = arith.mulf %29, %30 : vector<8x8xf32>
    %32 = vector.extract_strided_slice %6 {offsets = [0, 40], sizes = [8, 8], strides = [1, 1]} : vector<8x96xf32> to vector<8x8xf32>
    %33 = vector.extract_strided_slice %6 {offsets = [0, 72], sizes = [8, 8], strides = [1, 1]} : vector<8x96xf32> to vector<8x8xf32>
    %cst_15 = arith.constant dense<0.000000e+00> : vector<8x8xf32>
    %34 = tpu.matmul %31, %32, %cst_15 {dimension_numbers = #tpu.dot_dimension_numbers<[1], [1], [0], [0], [0, 0, 1, 0], [], []>} : vector<8x8xf32>, vector<8x8xf32>, vector<8x8xf32> -> vector<8x8xf32>
    %cst_16 = arith.constant dense<0xFF800000> : vector<8xf32>
    %35 = vector.multi_reduction <maximumf>, %34, %cst_16 [1] : vector<8x8xf32> to vector<8xf32>
    %36 = vector.shape_cast %35 : vector<8xf32> to vector<8x1xf32>
    %37 = vector.broadcast %36 : vector<8x1xf32> to vector<8x8xf32>
    %38 = arith.subf %34, %37 : vector<8x8xf32>
    %39 = math.exp %38 : vector<8x8xf32>
    %cst_17 = arith.constant dense<0.000000e+00> : vector<8xf32>
    %40 = vector.multi_reduction <add>, %39, %cst_17 [1] : vector<8x8xf32> to vector<8xf32>
    %41 = vector.shape_cast %40 : vector<8xf32> to vector<8x1xf32>
    %42 = tpu.reciprocal %41 {approx = true} : vector<8x1xf32> -> vector<8x1xf32>
    %43 = vector.broadcast %42 : vector<8x1xf32> to vector<8x8xf32>
    %44 = arith.mulf %39, %43 : vector<8x8xf32>
    %cst_18 = arith.constant dense<0.000000e+00> : vector<8x8xf32>
    %45 = tpu.matmul %44, %33, %cst_18 {dimension_numbers = #tpu.dot_dimension_numbers<[1], [0], [0], [1], [0, 0, 1, 1], [], []>} : vector<8x8xf32>, vector<8x8xf32>, vector<8x8xf32> -> vector<8x8xf32>
    %c0_19 = arith.constant 0 : index
    %c8 = arith.constant 8 : index
    %46 = vector.load %arg9[%c0_19, %c8] : memref<8x32xf32, #tpu.memory_space<vmem>>, vector<8x8xf32>
    tpu.vector_store %arg9[%c0_19, %c8], %45 {strides = array<i32>} : memref<8x32xf32, #tpu.memory_space<vmem>>, vector<8x8xf32>,
    %47 = vector.extract_strided_slice %6 {offsets = [0, 16], sizes = [8, 8], strides = [1, 1]} : vector<8x96xf32> to vector<8x8xf32>
    %cst_20 = arith.constant 0.353553385 : f32
    %48 = vector.broadcast %cst_20 : f32 to vector<8x8xf32>
    %49 = arith.mulf %47, %48 : vector<8x8xf32>
    %50 = vector.extract_strided_slice %6 {offsets = [0, 48], sizes = [8, 8], strides = [1, 1]} : vector<8x96xf32> to vector<8x8xf32>
    %51 = vector.extract_strided_slice %6 {offsets = [0, 80], sizes = [8, 8], strides = [1, 1]} : vector<8x96xf32> to vector<8x8xf32>
    %cst_21 = arith.constant dense<0.000000e+00> : vector<8x8xf32>
    %52 = tpu.matmul %49, %50, %cst_21 {dimension_numbers = #tpu.dot_dimension_numbers<[1], [1], [0], [0], [0, 0, 1, 0], [], []>} : vector<8x8xf32>, vector<8x8xf32>, vector<8x8xf32> -> vector<8x8xf32>
    %cst_22 = arith.constant dense<0xFF800000> : vector<8xf32>
    %53 = vector.multi_reduction <maximumf>, %52, %cst_22 [1] : vector<8x8xf32> to vector<8xf32>
    %54 = vector.shape_cast %53 : vector<8xf32> to vector<8x1xf32>
    %55 = vector.broadcast %54 : vector<8x1xf32> to vector<8x8xf32>
    %56 = arith.subf %52, %55 : vector<8x8xf32>
    %57 = math.exp %56 : vector<8x8xf32>
    %cst_23 = arith.constant dense<0.000000e+00> : vector<8xf32>
    %58 = vector.multi_reduction <add>, %57, %cst_23 [1] : vector<8x8xf32> to vector<8xf32>
    %59 = vector.shape_cast %58 : vector<8xf32> to vector<8x1xf32>
    %60 = tpu.reciprocal %59 {approx = true} : vector<8x1xf32> -> vector<8x1xf32>
    %61 = vector.broadcast %60 : vector<8x1xf32> to vector<8x8xf32>
    %62 = arith.mulf %57, %61 : vector<8x8xf32>
    %cst_24 = arith.constant dense<0.000000e+00> : vector<8x8xf32>
    %63 = tpu.matmul %62, %51, %cst_24 {dimension_numbers = #tpu.dot_dimension_numbers<[1], [0], [0], [1], [0, 0, 1, 1], [], []>} : vector<8x8xf32>, vector<8x8xf32>, vector<8x8xf32> -> vector<8x8xf32>
    %c0_25 = arith.constant 0 : index
    %c16 = arith.constant 16 : index
    %64 = vector.load %arg9[%c0_25, %c16] : memref<8x32xf32, #tpu.memory_space<vmem>>, vector<8x8xf32>
    tpu.vector_store %arg9[%c0_25, %c16], %63 {strides = array<i32>} : memref<8x32xf32, #tpu.memory_space<vmem>>, vector<8x8xf32>,
    %65 = vector.extract_strided_slice %6 {offsets = [0, 24], sizes = [8, 8], strides = [1, 1]} : vector<8x96xf32> to vector<8x8xf32>
    %cst_26 = arith.constant 0.353553385 : f32
    %66 = vector.broadcast %cst_26 : f32 to vector<8x8xf32>
    %67 = arith.mulf %65, %66 : vector<8x8xf32>
    %68 = vector.extract_strided_slice %6 {offsets = [0, 56], sizes = [8, 8], strides = [1, 1]} : vector<8x96xf32> to vector<8x8xf32>
    %69 = vector.extract_strided_slice %6 {offsets = [0, 88], sizes = [8, 8], strides = [1, 1]} : vector<8x96xf32> to vector<8x8xf32>
    %cst_27 = arith.constant dense<0.000000e+00> : vector<8x8xf32>
    %70 = tpu.matmul %67, %68, %cst_27 {dimension_numbers = #tpu.dot_dimension_numbers<[1], [1], [0], [0], [0, 0, 1, 0], [], []>} : vector<8x8xf32>, vector<8x8xf32>, vector<8x8xf32> -> vector<8x8xf32>
    %cst_28 = arith.constant dense<0xFF800000> : vector<8xf32>
    %71 = vector.multi_reduction <maximumf>, %70, %cst_28 [1] : vector<8x8xf32> to vector<8xf32>
    %72 = vector.shape_cast %71 : vector<8xf32> to vector<8x1xf32>
    %73 = vector.broadcast %72 : vector<8x1xf32> to vector<8x8xf32>
    %74 = arith.subf %70, %73 : vector<8x8xf32>
    %75 = math.exp %74 : vector<8x8xf32>
    %cst_29 = arith.constant dense<0.000000e+00> : vector<8xf32>
    %76 = vector.multi_reduction <add>, %75, %cst_29 [1] : vector<8x8xf32> to vector<8xf32>
    %77 = vector.shape_cast %76 : vector<8xf32> to vector<8x1xf32>
    %78 = tpu.reciprocal %77 {approx = true} : vector<8x1xf32> -> vector<8x1xf32>
    %79 = vector.broadcast %78 : vector<8x1xf32> to vector<8x8xf32>
    %80 = arith.mulf %75, %79 : vector<8x8xf32>
    %cst_30 = arith.constant dense<0.000000e+00> : vector<8x8xf32>
    %81 = tpu.matmul %80, %69, %cst_30 {dimension_numbers = #tpu.dot_dimension_numbers<[1], [0], [0], [1], [0, 0, 1, 1], [], []>} : vector<8x8xf32>, vector<8x8xf32>, vector<8x8xf32> -> vector<8x8xf32>
    %c0_31 = arith.constant 0 : index
    %c24 = arith.constant 24 : index
    %82 = vector.load %arg9[%c0_31, %c24] : memref<8x32xf32, #tpu.memory_space<vmem>>, vector<8x8xf32>
    tpu.vector_store %arg9[%c0_31, %c24], %81 {strides = array<i32>} : memref<8x32xf32, #tpu.memory_space<vmem>>, vector<8x8xf32>,
    %c0_32 = arith.constant 0 : index
    %c0_33 = arith.constant 0 : index
    %83 = vector.load %arg9[%c0_32, %c0_33] : memref<8x32xf32, #tpu.memory_space<vmem>>, vector<8x32xf32>
    %84 = arith.truncf %83 : vector<8x32xf32> to vector<8x32xbf16>
    %c0_34 = arith.constant 0 : index
    %c0_35 = arith.constant 0 : index
    %85 = vector.load %arg4[%c0_34, %c0_35] : memref<32x32xbf16, #tpu.memory_space<vmem>>, vector<32x32xbf16>
    %cst_36 = arith.constant dense<0.000000e+00> : vector<8x32xf32>
    %86 = tpu.matmul %84, %85, %cst_36 {dimension_numbers = #tpu.dot_dimension_numbers<[1], [0], [0], [1], [0, 0, 1, 1], [], []>} : vector<8x32xbf16>, vector<32x32xbf16>, vector<8x32xf32> -> vector<8x32xf32>
    %87 = vector.broadcast %8 : vector<1x32xf32> to vector<8x32xf32>
    %88 = arith.addf %86, %87 : vector<8x32xf32>
    %89 = arith.addf %0, %88 : vector<8x32xf32>
    %90 = arith.truncf %89 : vector<8x32xf32> to vector<8x32xbf16>
    %c0_37 = arith.constant 0 : index
    %c0_38 = arith.constant 0 : index
    %91 = vector.load %arg5[%c0_37, %c0_38] : memref<32x16xbf16, #tpu.memory_space<vmem>>, vector<32x16xbf16>
    %cst_39 = arith.constant dense<0.000000e+00> : vector<8x16xf32>
    %92 = tpu.matmul %90, %91, %cst_39 {dimension_numbers = #tpu.dot_dimension_numbers<[1], [0], [0], [1], [0, 0, 1, 1], [], []>} : vector<8x32xbf16>, vector<32x16xbf16>, vector<8x16xf32> -> vector<8x16xf32>
    %93 = vector.broadcast %9 : vector<1x16xf32> to vector<8x16xf32>
    %94 = arith.addf %92, %93 : vector<8x16xf32>
    %95 = arith.truncf %94 : vector<8x16xf32> to vector<8x16xbf16>
    %c0_40 = arith.constant 0 : index
    %c0_41 = arith.constant 0 : index
    %96 = vector.load %arg6[%c0_40, %c0_41] : memref<16x32xbf16, #tpu.memory_space<vmem>>, vector<16x32xbf16>
    %cst_42 = arith.constant dense<0.000000e+00> : vector<8x32xf32>
    %97 = tpu.matmul %95, %96, %cst_42 {dimension_numbers = #tpu.dot_dimension_numbers<[1], [0], [0], [1], [0, 0, 1, 1], [], []>} : vector<8x16xbf16>, vector<16x32xbf16>, vector<8x32xf32> -> vector<8x32xf32>
    %98 = vector.broadcast %10 : vector<1x32xf32> to vector<8x32xf32>
    %99 = arith.addf %97, %98 : vector<8x32xf32>
    %100 = arith.addf %89, %99 : vector<8x32xf32>
    %c0_43 = arith.constant 0 : index
    %c0_44 = arith.constant 0 : index
    %101 = vector.load %arg8[%c0_43, %c0_44] : memref<8x32xf32, #tpu.memory_space<vmem>>, vector<8x32xf32>
    tpu.vector_store %arg8[%c0_43, %c0_44], %100 {strides = array<i32>} : memref<8x32xf32, #tpu.memory_space<vmem>>, vector<8x32xf32>,
    return
  }
  func.func @transform_0(%arg0: i32) -> (i32, i32) {
    %c0_i32 = arith.constant 0 : i32
    %c0_i32_0 = arith.constant 0 : i32
    return %arg0, %c0_i32 : i32, i32
  }
  func.func @transform_1(%arg0: i32) -> (i32, i32) {
    %c0_i32 = arith.constant 0 : i32
    %c0_i32_0 = arith.constant 0 : i32
    %c0_i32_1 = arith.constant 0 : i32
    return %c0_i32, %c0_i32_0 : i32, i32
  }
  func.func @transform_2(%arg0: i32) -> (i32, i32) {
    %c0_i32 = arith.constant 0 : i32
    %c0_i32_0 = arith.constant 0 : i32
    %c0_i32_1 = arith.constant 0 : i32
    return %c0_i32, %c0_i32_0 : i32, i32
  }
  func.func @transform_3(%arg0: i32) -> (i32, i32) {
    %c0_i32 = arith.constant 0 : i32
    %c0_i32_0 = arith.constant 0 : i32
    %c0_i32_1 = arith.constant 0 : i32
    return %c0_i32, %c0_i32_0 : i32, i32
  }
  func.func @transform_4(%arg0: i32) -> (i32, i32) {
    %c0_i32 = arith.constant 0 : i32
    %c0_i32_0 = arith.constant 0 : i32
    %c0_i32_1 = arith.constant 0 : i32
    return %c0_i32, %c0_i32_0 : i32, i32
  }
  func.func @transform_5(%arg0: i32) -> (i32, i32) {
    %c0_i32 = arith.constant 0 : i32
    %c0_i32_0 = arith.constant 0 : i32
    %c0_i32_1 = arith.constant 0 : i32
    return %c0_i32, %c0_i32_0 : i32, i32
  }
  func.func @transform_6(%arg0: i32) -> (i32, i32) {
    %c0_i32 = arith.constant 0 : i32
    %c0_i32_0 = arith.constant 0 : i32
    %c0_i32_1 = arith.constant 0 : i32
    return %c0_i32, %c0_i32_0 : i32, i32
  }
  func.func @transform_7(%arg0: i32) -> (i32, i32) {
    %c0_i32 = arith.constant 0 : i32
    %c0_i32_0 = arith.constant 0 : i32
    return %arg0, %c0_i32 : i32, i32
  }
}

</mosaic_0001>

<llo_original>
// kernel: tpu_custom_call.1
$region0: #{tpu_custom_call.1}
  #allocation0 [shape = 'u32[]', space=smem, size = 0x4, offset = 0x4, fixed_abs, tag = 'smem constant byte address 0x4 - core index']
  #allocation1 [shape = 'u32[144,128]{1,0:T(1,128)}', space=vmem, size = 0x12000, scoped, tag = 'internal scratch']
  #allocation2 [shape = 'f32[8,32]{1,0:T(8,128)}', space=vmem, size = 0x1000, scoped, tag = 'scratch operand']
  %s0 = inlined_call_operand.vmem [shape: f32[16,32], index: 0, kind: input, shape index: {}]
  %s1 = inlined_call_operand.hbm [shape: bf16[32,96], index: 1, kind: input, shape index: {}]
  %s2 = inlined_call_operand.vmem [shape: f32[1,96], index: 2, kind: input, shape index: {}]
  %s3 = inlined_call_operand.vmem [shape: bf16[32,32], index: 3, kind: input, shape index: {}]
  %s4 = inlined_call_operand.vmem [shape: bf16[32,16], index: 4, kind: input, shape index: {}]
  %s5 = inlined_call_operand.vmem [shape: bf16[16,32], index: 5, kind: input, shape index: {}]
  %s6 = inlined_call_operand.vmem [shape: f32[1,80], index: 6, kind: input, shape index: {}]
  %s7 = inlined_call_operand.hbm [shape: f32[16,32], index: 7, kind: output, shape index: {}]
  %s8 = sld [smem:[#allocation0]]
  $region65: #{tpu_custom_call.1} parent=0
    _
  %s10 = ssub.s32 1, %s8
  %s11 = scalar_select 0, %s10, %s8
  $region1: #{tpu_custom_call.1} parent=0
    #allocation3 [shape = 'u8[8192]{0}', space=vmem, size = 0x2000, scoped, tag = 'input window, operand 1, single buffered']
    #allocation4 [shape = 's32[2]{0}', space=sflag, size = 0x8, scoped, tag = 'scoped memory for tpu_custom_call.1']
    #allocation5 [shape = 's32[2]{0}', space=sflag, size = 0x8, scoped, tag = 'scoped memory for tpu_custom_call.1']
    #allocation6 [shape = 'u8[8192]{0}', space=vmem, size = 0x2000, scoped, tag = 'output window, operand 0']
    %12 = vsyncpa [#allocation4], 0
    %13 = vsyncpa [#allocation5], 0
    %s14 = scalar_lea.sflag [#allocation5], 1
    %15 = vsyncpa %s14, 0
    loop: start=0, step=1, limit=4
    $region2: #{tpu_custom_call.1} parent=1 // loop_pre_header
      _
    $region3: #{tpu_custom_call.1} parent=1 // loop_header
      %s17 = sphi 0, %s21
      %p18 = scmp.ge.s32.totalorder %s17, 4
      %s27 = sphi 0, %s29
      %s30 = sphi 0, %s27
      %s31 = sphi 0, %s30
      %s47 = sphi 0, %s31
      %s51 = sphi 0, %s51
      %s53 = sphi 0, %s51
      %s54 = sphi 0, %s53
      %s68 = sphi 0, %s54
      %s72 = sphi 0, %s72
      %s74 = sphi 0, %s72
      %s75 = sphi 0, %s74
      %s89 = sphi 0, %s75
      %s93 = sphi 0, %s93
      %s95 = sphi 0, %s93
      %s96 = sphi 0, %s95
      %s110 = sphi 0, %s96
      %s114 = sphi 0, %s114
      %s116 = sphi 0, %s114
      %s117 = sphi 0, %s116
      %s131 = sphi 0, %s117
      %s135 = sphi 0, %s135
      %s137 = sphi 0, %s135
      %s138 = sphi 0, %s137
      %s152 = sphi 0, %s138
      %s156 = sphi 0, %s156
      %s158 = sphi 0, %s156
      %s159 = sphi 0, %s158
      %s173 = sphi 0, %s159
      %s179 = sphi 0, %s181
      %s182 = sphi 0, %s179
      %s183 = sphi 0, %s182
      %s199 = sphi 0, %s183
    $region4: #{tpu_custom_call.1} parent=1 // loop_header_branch
      %20 = sbr.rel (%p18) target = $region8
    $region5: #{tpu_custom_call.1} parent=1 // loop_body
      %s22 = ssub.s32 %s17, 1
      %s23 = ssub.s32 %s17, 2
      %s24 = sadd.s32 %s17, 1
      %s25 = ssub.s32 %s17, %s24
      %p26 = scmp.eq.s32.totalorder %s25, 0
      %s28 = sadd.s32 %s27, 1
      %s29 = scalar_select %p26, %s27, %s28
      %p32 = pneg %p26
      %p33 = scmp.eq.s32.totalorder %s17, 1
      %p34 = por %p32, %p33
      %p35 = scmp.ne.s32.totalorder %s27, %s30
      %p36 = scmp.eq.s32.totalorder %s17, 0
      %p37 = por %p35, %p36
      %p38 = scmp.ne.s32.totalorder %s27, %s30
      %p39 = scmp.eq.s32.totalorder %s22, 1
      %p40 = por %p38, %p39
      %p41 = scmp.ne.s32.totalorder %s30, %s31
      %p42 = scmp.eq.s32.totalorder %s22, 0
      %p43 = por %p41, %p42
      %p44 = scmp.ne.s32.totalorder %s30, %s31
      %p45 = scmp.eq.s32.totalorder %s23, 1
      %p46 = por %p44, %p45
      %p48 = scmp.ne.s32.totalorder %s31, %s47
      %p49 = scmp.eq.s32.totalorder %s23, 0
      %p50 = por %p48, %p49
      %s52 = sadd.s32 %s51, 1
      %p55 = scmp.eq.s32.totalorder %s17, 1
      %p56 = scmp.ne.s32.totalorder %s51, %s53
      %p57 = scmp.eq.s32.totalorder %s17, 0
      %p58 = por %p56, %p57
      %p59 = scmp.ne.s32.totalorder %s51, %s53
      %p60 = scmp.eq.s32.totalorder %s22, 1
      %p61 = por %p59, %p60
      %p62 = scmp.ne.s32.totalorder %s53, %s54
      %p63 = scmp.eq.s32.totalorder %s22, 0
      %p64 = por %p62, %p63
      %p65 = scmp.ne.s32.totalorder %s53, %s54
      %p66 = scmp.eq.s32.totalorder %s23, 1
      %p67 = por %p65, %p66
      %p69 = scmp.ne.s32.totalorder %s54, %s68
      %p70 = scmp.eq.s32.totalorder %s23, 0
      %p71 = por %p69, %p70
      %s73 = sadd.s32 %s72, 1
      %p76 = scmp.eq.s32.totalorder %s17, 1
      %p77 = scmp.ne.s32.totalorder %s72, %s74
      %p78 = scmp.eq.s32.totalorder %s17, 0
      %p79 = por %p77, %p78
      %p80 = scmp.ne.s32.totalorder %s72, %s74
      %p81 = scmp.eq.s32.totalorder %s22, 1
      %p82 = por %p80, %p81
      %p83 = scmp.ne.s32.totalorder %s74, %s75
      %p84 = scmp.eq.s32.totalorder %s22, 0
      %p85 = por %p83, %p84
      %p86 = scmp.ne.s32.totalorder %s74, %s75
      %p87 = scmp.eq.s32.totalorder %s23, 1
      %p88 = por %p86, %p87
      %p90 = scmp.ne.s32.totalorder %s75, %s89
      %p91 = scmp.eq.s32.totalorder %s23, 0
      %p92 = por %p90, %p91
      %s94 = sadd.s32 %s93, 1
      %p97 = scmp.eq.s32.totalorder %s17, 1
      %p98 = scmp.ne.s32.totalorder %s93, %s95
      %p99 = scmp.eq.s32.totalorder %s17, 0
      %p100 = por %p98, %p99
      %p101 = scmp.ne.s32.totalorder %s93, %s95
      %p102 = scmp.eq.s32.totalorder %s22, 1
      %p103 = por %p101, %p102
      %p104 = scmp.ne.s32.totalorder %s95, %s96
      %p105 = scmp.eq.s32.totalorder %s22, 0
      %p106 = por %p104, %p105
      %p107 = scmp.ne.s32.totalorder %s95, %s96
      %p108 = scmp.eq.s32.totalorder %s23, 1
      %p109 = por %p107, %p108
      %p111 = scmp.ne.s32.totalorder %s96, %s110
      %p112 = scmp.eq.s32.totalorder %s23, 0
      %p113 = por %p111, %p112
      %s115 = sadd.s32 %s114, 1
      %p118 = scmp.eq.s32.totalorder %s17, 1
      %p119 = scmp.ne.s32.totalorder %s114, %s116
      %p120 = scmp.eq.s32.totalorder %s17, 0
      %p121 = por %p119, %p120
      %p122 = scmp.ne.s32.totalorder %s114, %s116
      %p123 = scmp.eq.s32.totalorder %s22, 1
      %p124 = por %p122, %p123
      %p125 = scmp.ne.s32.totalorder %s116, %s117
      %p126 = scmp.eq.s32.totalorder %s22, 0
      %p127 = por %p125, %p126
      %p128 = scmp.ne.s32.totalorder %s116, %s117
      %p129 = scmp.eq.s32.totalorder %s23, 1
      %p130 = por %p128, %p129
      %p132 = scmp.ne.s32.totalorder %s117, %s131
      %p133 = scmp.eq.s32.totalorder %s23, 0
      %p134 = por %p132, %p133
      %s136 = sadd.s32 %s135, 1
      %p139 = scmp.eq.s32.totalorder %s17, 1
      %p140 = scmp.ne.s32.totalorder %s135, %s137
      %p141 = scmp.eq.s32.totalorder %s17, 0
      %p142 = por %p140, %p141
      %p143 = scmp.ne.s32.totalorder %s135, %s137
      %p144 = scmp.eq.s32.totalorder %s22, 1
      %p145 = por %p143, %p144
      %p146 = scmp.ne.s32.totalorder %s137, %s138
      %p147 = scmp.eq.s32.totalorder %s22, 0
      %p148 = por %p146, %p147
      %p149 = scmp.ne.s32.totalorder %s137, %s138
      %p150 = scmp.eq.s32.totalorder %s23, 1
      %p151 = por %p149, %p150
      %p153 = scmp.ne.s32.totalorder %s138, %s152
      %p154 = scmp.eq.s32.totalorder %s23, 0
      %p155 = por %p153, %p154
      %s157 = sadd.s32 %s156, 1
      %p160 = scmp.eq.s32.totalorder %s17, 1
      %p161 = scmp.ne.s32.totalorder %s156, %s158
      %p162 = scmp.eq.s32.totalorder %s17, 0
      %p163 = por %p161, %p162
      %p164 = scmp.ne.s32.totalorder %s156, %s158
      %p165 = scmp.eq.s32.totalorder %s22, 1
      %p166 = por %p164, %p165
      %p167 = scmp.ne.s32.totalorder %s158, %s159
      %p168 = scmp.eq.s32.totalorder %s22, 0
      %p169 = por %p167, %p168
      %p170 = scmp.ne.s32.totalorder %s158, %s159
      %p171 = scmp.eq.s32.totalorder %s23, 1
      %p172 = por %p170, %p171
      %p174 = scmp.ne.s32.totalorder %s159, %s173
      %p175 = scmp.eq.s32.totalorder %s23, 0
      %p176 = por %p174, %p175
      %s177 = ssub.s32 %s17, %s24
      %p178 = scmp.eq.s32.totalorder %s177, 0
      %s180 = sadd.s32 %s179, 1
      %s181 = scalar_select %p178, %s179, %s180
      %p184 = pneg %p178
      %p185 = scmp.eq.s32.totalorder %s17, 1
      %p186 = por %p184, %p185
      %p187 = scmp.ne.s32.totalorder %s179, %s182
      %p188 = scmp.eq.s32.totalorder %s17, 0
      %p189 = por %p187, %p188
      %p190 = scmp.ne.s32.totalorder %s179, %s182
      %p191 = scmp.eq.s32.totalorder %s22, 1
      %p192 = por %p190, %p191
      %p193 = scmp.ne.s32.totalorder %s182, %s183
      %p194 = scmp.eq.s32.totalorder %s22, 0
      %p195 = por %p193, %p194
      %p196 = scmp.ne.s32.totalorder %s182, %s183
      %p197 = scmp.eq.s32.totalorder %s23, 1
      %p198 = por %p196, %p197
      %p200 = scmp.ne.s32.totalorder %s183, %s199
      %p201 = scmp.eq.s32.totalorder %s23, 0
      %p202 = por %p200, %p201
      %p203 = scmp.le.s32.totalorder 1, %s17
      %p204 = scmp.lt.s32.totalorder %s17, 3
      %p205 = pnand %p203, %p204
      %p206 = pneg %p205
      // Predicated region
      $region9: #{tpu_custom_call.1} parent=5 // pred_check
        _
      $region10: #{tpu_custom_call.1} parent=5 // pred_check_branch
        %208 = sbr.rel (%p205) target = $region12
      $region11: #{tpu_custom_call.1} parent=5 // pred_region
        %s209 = ssub.s32 %s17, 1
        // Predicated region
        $region13: #{tpu_custom_call.1} parent=11 // pred_check
          %p210 = pneg %p64
        $region14: #{tpu_custom_call.1} parent=11 // pred_check_branch
          %212 = sbr.rel (%p210) target = $region16
        $region15: #{tpu_custom_call.1} parent=11 // pred_region
          %s214 = ssub.s32 256, 256
          %215 = vsyncadd [#allocation4], %s214
          %s216 = sshll.u32 [#allocation3], 4
          %s217 = int_to_ptr.vmem [resolvable:$true] %s216
          %222 = dma.hbm_to_vmem [thread:$0]  %s1, 256, %s217, [#allocation4], 64, 64, 4
        $region16: #{tpu_custom_call.1} parent=11 // pred_fallthru
          _
        // Predicated region
        $region17: #{tpu_custom_call.1} parent=11 // pred_check
          %p223 = pneg %p85
        $region18: #{tpu_custom_call.1} parent=11 // pred_check_branch
          %225 = sbr.rel (%p223) target = $region20
        $region19: #{tpu_custom_call.1} parent=11 // pred_region
          _
        $region20: #{tpu_custom_call.1} parent=11 // pred_fallthru
          _
        // Predicated region
        $region21: #{tpu_custom_call.1} parent=11 // pred_check
          %p226 = pneg %p106
        $region22: #{tpu_custom_call.1} parent=11 // pred_check_branch
          %228 = sbr.rel (%p226) target = $region24
        $region23: #{tpu_custom_call.1} parent=11 // pred_region
          _
        $region24: #{tpu_custom_call.1} parent=11 // pred_fallthru
          _
        // Predicated region
        $region25: #{tpu_custom_call.1} parent=11 // pred_check
          %p229 = pneg %p127
        $region26: #{tpu_custom_call.1} parent=11 // pred_check_branch
          %231 = sbr.rel (%p229) target = $region28
        $region27: #{tpu_custom_call.1} parent=11 // pred_region
          _
        $region28: #{tpu_custom_call.1} parent=11 // pred_fallthru
          _
        // Predicated region
        $region29: #{tpu_custom_call.1} parent=11 // pred_check
          %p232 = pneg %p148
        $region30: #{tpu_custom_call.1} parent=11 // pred_check_branch
          %234 = sbr.rel (%p232) target = $region32
        $region31: #{tpu_custom_call.1} parent=11 // pred_region
          _
        $region32: #{tpu_custom_call.1} parent=11 // pred_fallthru
          _
        // Predicated region
        $region33: #{tpu_custom_call.1} parent=11 // pred_check
          %p235 = pneg %p169
        $region34: #{tpu_custom_call.1} parent=11 // pred_check_branch
          %237 = sbr.rel (%p235) target = $region36
        $region35: #{tpu_custom_call.1} parent=11 // pred_region
          _
        $region36: #{tpu_custom_call.1} parent=11 // pred_fallthru
          _
      $region12: #{tpu_custom_call.1} parent=5 // pred_fallthru
        _
      %p238 = scmp.lt.s32.totalorder %s17, 2
      // Predicated region
      $region37: #{tpu_custom_call.1} parent=5 // pred_check
        %p239 = pneg %p238
      $region38: #{tpu_custom_call.1} parent=5 // pred_check_branch
        %241 = sbr.rel (%p239) target = $region40
      $region39: #{tpu_custom_call.1} parent=5 // pred_region
        // Predicated region
        $region41: #{tpu_custom_call.1} parent=39 // pred_check
          %p242 = pneg %p37
        $region42: #{tpu_custom_call.1} parent=39 // pred_check_branch
          %244 = sbr.rel (%p242) target = $region44
        $region43: #{tpu_custom_call.1} parent=39 // pred_region
          %p245 = scmp.lt.s32.totalorder %s17, 1
          %s246 = scalar_select %p245, %s17, 1
          %s247 = smul.addr %s246, 8
          %s248 = scalar_lea.vmem %s0, %s247
        $region44: #{tpu_custom_call.1} parent=39 // pred_fallthru
          _
      $region40: #{tpu_custom_call.1} parent=5 // pred_fallthru
        _
      %p249 = scmp.le.s32.totalorder 1, %s17
      %p250 = scmp.lt.s32.totalorder %s17, 3
      %p251 = pnand %p249, %p250
      %p252 = pneg %p251
      // Predicated region
      $region45: #{tpu_custom_call.1} parent=5 // pred_check
        _
      $region46: #{tpu_custom_call.1} parent=5 // pred_check_branch
        %254 = sbr.rel (%p251) target = $region48
      $region47: #{tpu_custom_call.1} parent=5 // pred_region
        %s255 = ssub.s32 %s17, 1
        // Predicated region
        $region49: #{tpu_custom_call.1} parent=47 // pred_check
          %p256 = pneg %p64
        $region50: #{tpu_custom_call.1} parent=47 // pred_check_branch
          %258 = sbr.rel (%p256) target = $region52
        $region51: #{tpu_custom_call.1} parent=47 // pred_region
          %259 = dma.done [#allocation4], 256
        $region52: #{tpu_custom_call.1} parent=47 // pred_fallthru
          _
        %p260 = scmp.lt.s32.totalorder %s22, 1
        %s261 = scalar_select %p260, %s22, 1
        %s262 = smul.addr %s261, 8
        %s263 = scalar_lea.vmem %s0, %s262
        %p264 = pneg %p43
        %p265 = pneg %p40
        %p266 = pneg %p64
        %p267 = pneg %p61
        %p268 = pneg %p85
        %p269 = pneg %p82
        %p270 = pneg %p106
        %p271 = pneg %p103
        %p272 = pneg %p127
        %p273 = pneg %p124
        %p274 = pneg %p148
        %p275 = pneg %p145
        %p276 = pneg %p169
        %p277 = pneg %p166
        %p278 = pneg %p195
        %p279 = pneg %p192
        %s280 = sand.u32 %s182, 1
        %s281 = scalar_lea.sflag [#allocation5], %s280
        %s282 = sand.u32 %s182, 1
        %s283 = smul.addr %s282, 8
        %s284 = scalar_lea.vmem [#allocation6], %s283
        %p285 = scmp.lt.s32.totalorder %s22, 1
        %s286 = scalar_select %p285, %s22, 1
        %s287 = smul.addr %s286, 8
        %s288 = scalar_lea.vmem %s0, %s287
        %v290 = vld [vmem:[%s288] sm:$0xff]
        %v291 = vpack.c.bf16 %v290, %v290
        %v292 = vld [vmem:[#allocation3] sm:$0xf]
        %v293 = vld [vmem:[#allocation3 + $0x4] sm:$0xf]
        %v294 = vld [vmem:[#allocation3 + $0x8] sm:$0xf]
        %v295 = vld [vmem:[#allocation3 + $0xc] sm:$0xf]
        %v296 = vld [vmem:[%s2] sm:$0x1]
        %v298 = vlaneseq
        %v299 = vshrl.u32 %v298, 7
        %v300 = vsub.s32 0, %v299
        %v301 = vrot.slane %v296, %v300
        %v307 = vunpack.c.l.b16 %v292
        %v308 = vunpack.c.l.b16 %v293
        %v309 = vunpack.c.l.b16 %v294
        %v310 = vunpack.c.l.b16 %v295
        %v311 = vpack.c.b16 %v308, %v307
        %v312 = vpack.c.b16 %v310, %v309
        %vm315 = vcmask 261120
        %v317 = vsel %vm315, %v291, 0
        %319 = vmatprep.subr.bf16.mxu0 0
        %320 = vmatpush1.bf16.msra.mxu0 %v311
        %321 = vmatprep.subr.bf16.mxu0 0
        %322 = vmatpush1.bf16.msra.mxu0 %v312
        %323 = vmatprep.subr.bf16.mxu0 0
        %324 = vmatpush1.bf16.msra.mxu0 0
        %325 = vmatprep.subr.bf16.mxu0 0
        %326 = vmatpush1.bf16.msra.mxu0 0
        %327 = vmatprep.subr.bf16.mxu0 0
        %328 = vmatpush1.bf16.msra.mxu0 0
        %329 = vmatprep.subr.bf16.mxu0 0
        %330 = vmatpush1.bf16.msra.mxu0 0
        %331 = vmatprep.subr.bf16.mxu0 0
        %332 = vmatpush1.bf16.msra.mxu0 0
        %333 = vmatprep.subr.bf16.mxu0 0
        %334 = vmatpush1.bf16.msra.mxu0 0
        %335 = vmatprep.subr.bf16.mxu0 0
        %336 = vmatpush1.bf16.msra.mxu0 0
        %337 = vmatprep.subr.bf16.mxu0 0
        %338 = vmatpush1.bf16.msra.mxu0 0
        %339 = vmatprep.subr.bf16.mxu0 0
        %340 = vmatpush1.bf16.msra.mxu0 0
        %341 = vmatprep.subr.bf16.mxu0 0
        %342 = vmatpush1.bf16.msra.mxu0 0
        %343 = vmatprep.subr.bf16.mxu0 0
        %344 = vmatpush1.bf16.msra.mxu0 0
        %345 = vmatprep.subr.bf16.mxu0 0
        %346 = vmatpush1.bf16.msra.mxu0 0
        %347 = vmatprep.subr.bf16.mxu0 0
        %348 = vmatpush1.bf16.msra.mxu0 0
        %349 = vmatprep.subr.bf16.mxu0 0
        %350 = vmatpush1.bf16.msra.mxu0 0
        %351 = vmatprep.mubr.bf16.mxu0 0
        %352 = vmatmul.mubr.bf16.gmra.mrb[0].mxu0 %v317
        %v353 = vpop.f32.mrb[0].mxu0
        %v354 = vadd.f32 %v301, %v353
        %v355 = vpop.f32.mrb[0].mxu0
        %v356 = vpop.f32.mrb[0].mxu0
        %v357 = vpop.f32.mrb[0].mxu0
        %358 = vdwg.mxu0
        %v359 = vld [vmem:[%s6] sm:$0x1]
        %v360 = vmul.f32 %v354, 0.35355338
        %362 = vrot.lane.b32.xlu0 %v354, 96
        %v363 = vpop.permute.xlu0 %362
        %vm364 = vcmask 64512
        %v366 = vsel %vm364, %v360, 0
        %v368 = vsel %vm364, %v363, 0
        %370 = vmatprep.subr.mxu0 0.0
        %371 = vmatpush1.xpose.msra.mxu0 %v368
        %372 = vmatprep.subr.mxu0 0.0
        %373 = vmatpush1.xpose.msra.mxu0 0.0
        %374 = vmatprep.subr.mxu0 0.0
        %375 = vmatpush1.xpose.msra.mxu0 0.0
        %376 = vmatprep.subr.mxu0 0.0
        %377 = vmatpush1.xpose.msra.mxu0 0.0
        %378 = vmatprep.subr.mxu0 0.0
        %379 = vmatpush1.xpose.msra.mxu0 0.0
        %380 = vmatprep.subr.mxu0 0.0
        %381 = vmatpush1.xpose.msra.mxu0 0.0
        %382 = vmatprep.subr.mxu0 0.0
        %383 = vmatpush1.xpose.msra.mxu0 0.0
        %384 = vmatprep.subr.mxu0 0.0
        %385 = vmatpush1.xpose.msra.mxu0 0.0
        %386 = vmatprep.subr.mxu0 0.0
        %387 = vmatpush1.xpose.msra.mxu0 0.0
        %388 = vmatprep.subr.mxu0 0.0
        %389 = vmatpush1.xpose.msra.mxu0 0.0
        %390 = vmatprep.subr.mxu0 0.0
        %391 = vmatpush1.xpose.msra.mxu0 0.0
        %392 = vmatprep.subr.mxu0 0.0
        %393 = vmatpush1.xpose.msra.mxu0 0.0
        %394 = vmatprep.subr.mxu0 0.0
        %395 = vmatpush1.xpose.msra.mxu0 0.0
        %396 = vmatprep.subr.mxu0 0.0
        %397 = vmatpush1.xpose.msra.mxu0 0.0
        %398 = vmatprep.subr.mxu0 0.0
        %399 = vmatpush1.xpose.msra.mxu0 0.0
        %400 = vmatprep.subr.mxu0 0.0
        %401 = vmatpush1.xpose.msra.mxu0 0.0
        %402 = vmatprep.subr.mxu0 0.0
        %403 = vmatpush1.xpose.msra.mxu0 0.0
        %404 = vmatprep.subr.mxu0 0.0
        %405 = vmatpush1.xpose.msra.mxu0 0.0
        %406 = vmatprep.subr.mxu0 0.0
        %407 = vmatpush1.xpose.msra.mxu0 0.0
        %408 = vmatprep.subr.mxu0 0.0
        %409 = vmatpush1.xpose.msra.mxu0 0.0
        %410 = vmatprep.subr.mxu0 0.0
        %411 = vmatpush1.xpose.msra.mxu0 0.0
        %412 = vmatprep.subr.mxu0 0.0
        %413 = vmatpush1.xpose.msra.mxu0 0.0
        %414 = vmatprep.subr.mxu0 0.0
        %415 = vmatpush1.xpose.msra.mxu0 0.0
        %416 = vmatprep.subr.mxu0 0.0
        %417 = vmatpush1.xpose.msra.mxu0 0.0
        %418 = vmatprep.subr.mxu0 0.0
        %419 = vmatpush1.xpose.msra.mxu0 0.0
        %420 = vmatprep.subr.mxu0 0.0
        %421 = vmatpush1.xpose.msra.mxu0 0.0
        %422 = vmatprep.subr.mxu0 0.0
        %423 = vmatpush1.xpose.msra.mxu0 0.0
        %424 = vmatprep.subr.mxu0 0.0
        %425 = vmatpush1.xpose.msra.mxu0 0.0
        %426 = vmatprep.subr.mxu0 0.0
        %427 = vmatpush1.xpose.msra.mxu0 0.0
        %428 = vmatprep.subr.mxu0 0.0
        %429 = vmatpush1.xpose.msra.mxu0 0.0
        %430 = vmatprep.subr.mxu0 0.0
        %431 = vmatpush1.xpose.msra.mxu0 0.0
        %432 = vmatprep.subr.mxu0 0.0
        %433 = vmatpush1.xpose.msra.mxu0 0.0
        %434 = vmatprep.mubr.f32.mxu0 0.0
        %435 = vmatmul.mubr.f32.gmra.mrb[0].mxu0 %v366
        %v436 = vpop.f32.mrb[0].mxu0
        %v437 = vadd.f32 0.0, %v436
        %v438 = vpop.f32.mrb[0].mxu0
        %439 = vdwg.mxu0
        %v440 = vsel %vm364, %v437, -inf
        %441 = vmax.xlane.f32.xlu0 %v440
        %v442 = vpop.xlane.xlu0 %441
        %v443 = vsub.f32 %v437, %v442
        %v444 = vmul.f32 %v443, 1.442695
        %v445 = vpow.pop %v444
        %v446 = vsel %vm364, %v445, 0.0
        %447 = vadd.xlane.f32.xlu0 %v446
        %v448 = vpop.xlane.xlu0 %447
        %v449 = vrcp.pop %v448
        %v450 = vmul.f32 %v445, %v449
        %451 = vrot.lane.b32.xlu0 %v354, 64
        %v452 = vpop.permute.xlu0 %451
        %v455 = vsel %vm364, %v450, 0
        %457 = vmatprep.subr.mxu0 0.0
        %458 = vmatpush1.msra.mxu0 %v452
        %459 = vmatprep.subr.mxu0 0.0
        %460 = vmatpush1.msra.mxu0 0.0
        %461 = vmatprep.subr.mxu0 0.0
        %462 = vmatpush1.msra.mxu0 0.0
        %463 = vmatprep.subr.mxu0 0.0
        %464 = vmatpush1.msra.mxu0 0.0
        %465 = vmatprep.subr.mxu0 0.0
        %466 = vmatpush1.msra.mxu0 0.0
        %467 = vmatprep.subr.mxu0 0.0
        %468 = vmatpush1.msra.mxu0 0.0
        %469 = vmatprep.subr.mxu0 0.0
        %470 = vmatpush1.msra.mxu0 0.0
        %471 = vmatprep.subr.mxu0 0.0
        %472 = vmatpush1.msra.mxu0 0.0
        %473 = vmatprep.subr.mxu0 0.0
        %474 = vmatpush1.msra.mxu0 0.0
        %475 = vmatprep.subr.mxu0 0.0
        %476 = vmatpush1.msra.mxu0 0.0
        %477 = vmatprep.subr.mxu0 0.0
        %478 = vmatpush1.msra.mxu0 0.0
        %479 = vmatprep.subr.mxu0 0.0
        %480 = vmatpush1.msra.mxu0 0.0
        %481 = vmatprep.subr.mxu0 0.0
        %482 = vmatpush1.msra.mxu0 0.0
        %483 = vmatprep.subr.mxu0 0.0
        %484 = vmatpush1.msra.mxu0 0.0
        %485 = vmatprep.subr.mxu0 0.0
        %486 = vmatpush1.msra.mxu0 0.0
        %487 = vmatprep.subr.mxu0 0.0
        %488 = vmatpush1.msra.mxu0 0.0
        %489 = vmatprep.subr.mxu0 0.0
        %490 = vmatpush1.msra.mxu0 0.0
        %491 = vmatprep.subr.mxu0 0.0
        %492 = vmatpush1.msra.mxu0 0.0
        %493 = vmatprep.subr.mxu0 0.0
        %494 = vmatpush1.msra.mxu0 0.0
        %495 = vmatprep.subr.mxu0 0.0
        %496 = vmatpush1.msra.mxu0 0.0
        %497 = vmatprep.subr.mxu0 0.0
        %498 = vmatpush1.msra.mxu0 0.0
        %499 = vmatprep.subr.mxu0 0.0
        %500 = vmatpush1.msra.mxu0 0.0
        %501 = vmatprep.subr.mxu0 0.0
        %502 = vmatpush1.msra.mxu0 0.0
        %503 = vmatprep.subr.mxu0 0.0
        %504 = vmatpush1.msra.mxu0 0.0
        %505 = vmatprep.subr.mxu0 0.0
        %506 = vmatpush1.msra.mxu0 0.0
        %507 = vmatprep.subr.mxu0 0.0
        %508 = vmatpush1.msra.mxu0 0.0
        %509 = vmatprep.subr.mxu0 0.0
        %510 = vmatpush1.msra.mxu0 0.0
        %511 = vmatprep.subr.mxu0 0.0
        %512 = vmatpush1.msra.mxu0 0.0
        %513 = vmatprep.subr.mxu0 0.0
        %514 = vmatpush1.msra.mxu0 0.0
        %515 = vmatprep.subr.mxu0 0.0
        %516 = vmatpush1.msra.mxu0 0.0
        %517 = vmatprep.subr.mxu0 0.0
        %518 = vmatpush1.msra.mxu0 0.0
        %519 = vmatprep.subr.mxu0 0.0
        %520 = vmatpush1.msra.mxu0 0.0
        %521 = vmatprep.mubr.f32.mxu0 0.0
        %522 = vmatmul.mubr.f32.gmra.mrb[0].mxu0 %v455
        %v523 = vpop.f32.mrb[0].mxu0
        %v524 = vadd.f32 0.0, %v523
        %v525 = vpop.f32.mrb[0].mxu0
        %526 = vdwg.mxu0
        %527 = vst.msk [vmem:[#allocation2] sm:$0xff] %vm364, %v524
        %528 = vrot.lane.b32.xlu0 %v360, 120
        %v529 = vpop.permute.xlu0 %528
        %530 = vrot.lane.b32.xlu0 %v354, 88
        %v531 = vpop.permute.xlu0 %530
        %v532 = vsel %vm364, %v529, 0
        %v534 = vsel %vm364, %v531, 0
        %536 = vmatprep.subr.mxu0 0.0
        %537 = vmatpush1.xpose.msra.mxu0 %v534
        %538 = vmatprep.subr.mxu0 0.0
        %539 = vmatpush1.xpose.msra.mxu0 0.0
        %540 = vmatprep.subr.mxu0 0.0
        %541 = vmatpush1.xpose.msra.mxu0 0.0
        %542 = vmatprep.subr.mxu0 0.0
        %543 = vmatpush1.xpose.msra.mxu0 0.0
        %544 = vmatprep.subr.mxu0 0.0
        %545 = vmatpush1.xpose.msra.mxu0 0.0
        %546 = vmatprep.subr.mxu0 0.0
        %547 = vmatpush1.xpose.msra.mxu0 0.0
        %548 = vmatprep.subr.mxu0 0.0
        %549 = vmatpush1.xpose.msra.mxu0 0.0
        %550 = vmatprep.subr.mxu0 0.0
        %551 = vmatpush1.xpose.msra.mxu0 0.0
        %552 = vmatprep.subr.mxu0 0.0
        %553 = vmatpush1.xpose.msra.mxu0 0.0
        %554 = vmatprep.subr.mxu0 0.0
        %555 = vmatpush1.xpose.msra.mxu0 0.0
        %556 = vmatprep.subr.mxu0 0.0
        %557 = vmatpush1.xpose.msra.mxu0 0.0
        %558 = vmatprep.subr.mxu0 0.0
        %559 = vmatpush1.xpose.msra.mxu0 0.0
        %560 = vmatprep.subr.mxu0 0.0
        %561 = vmatpush1.xpose.msra.mxu0 0.0
        %562 = vmatprep.subr.mxu0 0.0
        %563 = vmatpush1.xpose.msra.mxu0 0.0
        %564 = vmatprep.subr.mxu0 0.0
        %565 = vmatpush1.xpose.msra.mxu0 0.0
        %566 = vmatprep.subr.mxu0 0.0
        %567 = vmatpush1.xpose.msra.mxu0 0.0
        %568 = vmatprep.subr.mxu0 0.0
        %569 = vmatpush1.xpose.msra.mxu0 0.0
        %570 = vmatprep.subr.mxu0 0.0
        %571 = vmatpush1.xpose.msra.mxu0 0.0
        %572 = vmatprep.subr.mxu0 0.0
        %573 = vmatpush1.xpose.msra.mxu0 0.0
        %574 = vmatprep.subr.mxu0 0.0
        %575 = vmatpush1.xpose.msra.mxu0 0.0
        %576 = vmatprep.subr.mxu0 0.0
        %577 = vmatpush1.xpose.msra.mxu0 0.0
        %578 = vmatprep.subr.mxu0 0.0
        %579 = vmatpush1.xpose.msra.mxu0 0.0
        %580 = vmatprep.subr.mxu0 0.0
        %581 = vmatpush1.xpose.msra.mxu0 0.0
        %582 = vmatprep.subr.mxu0 0.0
        %583 = vmatpush1.xpose.msra.mxu0 0.0
        %584 = vmatprep.subr.mxu0 0.0
        %585 = vmatpush1.xpose.msra.mxu0 0.0
        %586 = vmatprep.subr.mxu0 0.0
        %587 = vmatpush1.xpose.msra.mxu0 0.0
        %588 = vmatprep.subr.mxu0 0.0
        %589 = vmatpush1.xpose.msra.mxu0 0.0
        %590 = vmatprep.subr.mxu0 0.0
        %591 = vmatpush1.xpose.msra.mxu0 0.0
        %592 = vmatprep.subr.mxu0 0.0
        %593 = vmatpush1.xpose.msra.mxu0 0.0
        %594 = vmatprep.subr.mxu0 0.0
        %595 = vmatpush1.xpose.msra.mxu0 0.0
        %596 = vmatprep.subr.mxu0 0.0
        %597 = vmatpush1.xpose.msra.mxu0 0.0
        %598 = vmatprep.subr.mxu0 0.0
        %599 = vmatpush1.xpose.msra.mxu0 0.0
        %600 = vmatprep.mubr.f32.mxu0 0.0
        %601 = vmatmul.mubr.f32.gmra.mrb[0].mxu0 %v532
        %v602 = vpop.f32.mrb[0].mxu0
        %v603 = vadd.f32 0.0, %v602
        %v604 = vpop.f32.mrb[0].mxu0
        %605 = vdwg.mxu0
        %v606 = vsel %vm364, %v603, -inf
        %607 = vmax.xlane.f32.xlu0 %v606
        %v608 = vpop.xlane.xlu0 %607
        %v609 = vsub.f32 %v603, %v608
        %v610 = vmul.f32 %v609, 1.442695
        %v611 = vpow.pop %v610
        %v612 = vsel %vm364, %v611, 0.0
        %613 = vadd.xlane.f32.xlu0 %v612
        %v614 = vpop.xlane.xlu0 %613
        %v615 = vrcp.pop %v614
        %v616 = vmul.f32 %v611, %v615
        %617 = vrot.lane.b32.xlu0 %v354, 56
        %v618 = vpop.permute.xlu0 %617
        %v621 = vsel %vm364, %v616, 0
        %623 = vmatprep.subr.mxu0 0.0
        %624 = vmatpush1.msra.mxu0 %v618
        %625 = vmatprep.subr.mxu0 0.0
        %626 = vmatpush1.msra.mxu0 0.0
        %627 = vmatprep.subr.mxu0 0.0
        %628 = vmatpush1.msra.mxu0 0.0
        %629 = vmatprep.subr.mxu0 0.0
        %630 = vmatpush1.msra.mxu0 0.0
        %631 = vmatprep.subr.mxu0 0.0
        %632 = vmatpush1.msra.mxu0 0.0
        %633 = vmatprep.subr.mxu0 0.0
        %634 = vmatpush1.msra.mxu0 0.0
        %635 = vmatprep.subr.mxu0 0.0
        %636 = vmatpush1.msra.mxu0 0.0
        %637 = vmatprep.subr.mxu0 0.0
        %638 = vmatpush1.msra.mxu0 0.0
        %639 = vmatprep.subr.mxu0 0.0
        %640 = vmatpush1.msra.mxu0 0.0
        %641 = vmatprep.subr.mxu0 0.0
        %642 = vmatpush1.msra.mxu0 0.0
        %643 = vmatprep.subr.mxu0 0.0
        %644 = vmatpush1.msra.mxu0 0.0
        %645 = vmatprep.subr.mxu0 0.0
        %646 = vmatpush1.msra.mxu0 0.0
        %647 = vmatprep.subr.mxu0 0.0
        %648 = vmatpush1.msra.mxu0 0.0
        %649 = vmatprep.subr.mxu0 0.0
        %650 = vmatpush1.msra.mxu0 0.0
        %651 = vmatprep.subr.mxu0 0.0
        %652 = vmatpush1.msra.mxu0 0.0
        %653 = vmatprep.subr.mxu0 0.0
        %654 = vmatpush1.msra.mxu0 0.0
        %655 = vmatprep.subr.mxu0 0.0
        %656 = vmatpush1.msra.mxu0 0.0
        %657 = vmatprep.subr.mxu0 0.0
        %658 = vmatpush1.msra.mxu0 0.0
        %659 = vmatprep.subr.mxu0 0.0
        %660 = vmatpush1.msra.mxu0 0.0
        %661 = vmatprep.subr.mxu0 0.0
        %662 = vmatpush1.msra.mxu0 0.0
        %663 = vmatprep.subr.mxu0 0.0
        %664 = vmatpush1.msra.mxu0 0.0
        %665 = vmatprep.subr.mxu0 0.0
        %666 = vmatpush1.msra.mxu0 0.0
        %667 = vmatprep.subr.mxu0 0.0
        %668 = vmatpush1.msra.mxu0 0.0
        %669 = vmatprep.subr.mxu0 0.0
        %670 = vmatpush1.msra.mxu0 0.0
        %671 = vmatprep.subr.mxu0 0.0
        %672 = vmatpush1.msra.mxu0 0.0
        %673 = vmatprep.subr.mxu0 0.0
        %674 = vmatpush1.msra.mxu0 0.0
        %675 = vmatprep.subr.mxu0 0.0
        %676 = vmatpush1.msra.mxu0 0.0
        %677 = vmatprep.subr.mxu0 0.0
        %678 = vmatpush1.msra.mxu0 0.0
        %679 = vmatprep.subr.mxu0 0.0
        %680 = vmatpush1.msra.mxu0 0.0
        %681 = vmatprep.subr.mxu0 0.0
        %682 = vmatpush1.msra.mxu0 0.0
        %683 = vmatprep.subr.mxu0 0.0
        %684 = vmatpush1.msra.mxu0 0.0
        %685 = vmatprep.subr.mxu0 0.0
        %686 = vmatpush1.msra.mxu0 0.0
        %687 = vmatprep.mubr.f32.mxu0 0.0
        %688 = vmatmul.mubr.f32.gmra.mrb[0].mxu0 %v621
        %v689 = vpop.f32.mrb[0].mxu0
        %v690 = vadd.f32 0.0, %v689
        %v691 = vpop.f32.mrb[0].mxu0
        %692 = vdwg.mxu0
        %694 = vrot.lane.b32.xlu0 %v690, 8
        %v695 = vpop.permute.xlu0 %694
        %vm697 = vcmask 130112
        %698 = vst.msk [vmem:[#allocation2] sm:$0xff] %vm697, %v695
        %699 = vrot.lane.b32.xlu0 %v360, 112
        %v700 = vpop.permute.xlu0 %699
        %701 = vrot.lane.b32.xlu0 %v354, 80
        %v702 = vpop.permute.xlu0 %701
        %v703 = vsel %vm364, %v700, 0
        %v705 = vsel %vm364, %v702, 0
        %707 = vmatprep.subr.mxu0 0.0
        %708 = vmatpush1.xpose.msra.mxu0 %v705
        %709 = vmatprep.subr.mxu0 0.0
        %710 = vmatpush1.xpose.msra.mxu0 0.0
        %711 = vmatprep.subr.mxu0 0.0
        %712 = vmatpush1.xpose.msra.mxu0 0.0
        %713 = vmatprep.subr.mxu0 0.0
        %714 = vmatpush1.xpose.msra.mxu0 0.0
        %715 = vmatprep.subr.mxu0 0.0
        %716 = vmatpush1.xpose.msra.mxu0 0.0
        %717 = vmatprep.subr.mxu0 0.0
        %718 = vmatpush1.xpose.msra.mxu0 0.0
        %719 = vmatprep.subr.mxu0 0.0
        %720 = vmatpush1.xpose.msra.mxu0 0.0
        %721 = vmatprep.subr.mxu0 0.0
        %722 = vmatpush1.xpose.msra.mxu0 0.0
        %723 = vmatprep.subr.mxu0 0.0
        %724 = vmatpush1.xpose.msra.mxu0 0.0
        %725 = vmatprep.subr.mxu0 0.0
        %726 = vmatpush1.xpose.msra.mxu0 0.0
        %727 = vmatprep.subr.mxu0 0.0
        %728 = vmatpush1.xpose.msra.mxu0 0.0
        %729 = vmatprep.subr.mxu0 0.0
        %730 = vmatpush1.xpose.msra.mxu0 0.0
        %731 = vmatprep.subr.mxu0 0.0
        %732 = vmatpush1.xpose.msra.mxu0 0.0
        %733 = vmatprep.subr.mxu0 0.0
        %734 = vmatpush1.xpose.msra.mxu0 0.0
        %735 = vmatprep.subr.mxu0 0.0
        %736 = vmatpush1.xpose.msra.mxu0 0.0
        %737 = vmatprep.subr.mxu0 0.0
        %738 = vmatpush1.xpose.msra.mxu0 0.0
        %739 = vmatprep.subr.mxu0 0.0
        %740 = vmatpush1.xpose.msra.mxu0 0.0
        %741 = vmatprep.subr.mxu0 0.0
        %742 = vmatpush1.xpose.msra.mxu0 0.0
        %743 = vmatprep.subr.mxu0 0.0
        %744 = vmatpush1.xpose.msra.mxu0 0.0
        %745 = vmatprep.subr.mxu0 0.0
        %746 = vmatpush1.xpose.msra.mxu0 0.0
        %747 = vmatprep.subr.mxu0 0.0
        %748 = vmatpush1.xpose.msra.mxu0 0.0
        %749 = vmatprep.subr.mxu0 0.0
        %750 = vmatpush1.xpose.msra.mxu0 0.0
        %751 = vmatprep.subr.mxu0 0.0
        %752 = vmatpush1.xpose.msra.mxu0 0.0
        %753 = vmatprep.subr.mxu0 0.0
        %754 = vmatpush1.xpose.msra.mxu0 0.0
        %755 = vmatprep.subr.mxu0 0.0
        %756 = vmatpush1.xpose.msra.mxu0 0.0
        %757 = vmatprep.subr.mxu0 0.0
        %758 = vmatpush1.xpose.msra.mxu0 0.0
        %759 = vmatprep.subr.mxu0 0.0
        %760 = vmatpush1.xpose.msra.mxu0 0.0
        %761 = vmatprep.subr.mxu0 0.0
        %762 = vmatpush1.xpose.msra.mxu0 0.0
        %763 = vmatprep.subr.mxu0 0.0
        %764 = vmatpush1.xpose.msra.mxu0 0.0
        %765 = vmatprep.subr.mxu0 0.0
        %766 = vmatpush1.xpose.msra.mxu0 0.0
        %767 = vmatprep.subr.mxu0 0.0
        %768 = vmatpush1.xpose.msra.mxu0 0.0
        %769 = vmatprep.subr.mxu0 0.0
        %770 = vmatpush1.xpose.msra.mxu0 0.0
        %771 = vmatprep.mubr.f32.mxu0 0.0
        %772 = vmatmul.mubr.f32.gmra.mrb[0].mxu0 %v703
        %v773 = vpop.f32.mrb[0].mxu0
        %v774 = vadd.f32 0.0, %v773
        %v775 = vpop.f32.mrb[0].mxu0
        %776 = vdwg.mxu0
        %v777 = vsel %vm364, %v774, -inf
        %778 = vmax.xlane.f32.xlu0 %v777
        %v779 = vpop.xlane.xlu0 %778
        %v780 = vsub.f32 %v774, %v779
        %v781 = vmul.f32 %v780, 1.442695
        %v782 = vpow.pop %v781
        %v783 = vsel %vm364, %v782, 0.0
        %784 = vadd.xlane.f32.xlu0 %v783
        %v785 = vpop.xlane.xlu0 %784
        %v786 = vrcp.pop %v785
        %v787 = vmul.f32 %v782, %v786
        %788 = vrot.lane.b32.xlu0 %v354, 48
        %v789 = vpop.permute.xlu0 %788
        %v792 = vsel %vm364, %v787, 0
        %794 = vmatprep.subr.mxu0 0.0
        %795 = vmatpush1.msra.mxu0 %v789
        %796 = vmatprep.subr.mxu0 0.0
        %797 = vmatpush1.msra.mxu0 0.0
        %798 = vmatprep.subr.mxu0 0.0
        %799 = vmatpush1.msra.mxu0 0.0
        %800 = vmatprep.subr.mxu0 0.0
        %801 = vmatpush1.msra.mxu0 0.0
        %802 = vmatprep.subr.mxu0 0.0
        %803 = vmatpush1.msra.mxu0 0.0
        %804 = vmatprep.subr.mxu0 0.0
        %805 = vmatpush1.msra.mxu0 0.0
        %806 = vmatprep.subr.mxu0 0.0
        %807 = vmatpush1.msra.mxu0 0.0
        %808 = vmatprep.subr.mxu0 0.0
        %809 = vmatpush1.msra.mxu0 0.0
        %810 = vmatprep.subr.mxu0 0.0
        %811 = vmatpush1.msra.mxu0 0.0
        %812 = vmatprep.subr.mxu0 0.0
        %813 = vmatpush1.msra.mxu0 0.0
        %814 = vmatprep.subr.mxu0 0.0
        %815 = vmatpush1.msra.mxu0 0.0
        %816 = vmatprep.subr.mxu0 0.0
        %817 = vmatpush1.msra.mxu0 0.0
        %818 = vmatprep.subr.mxu0 0.0
        %819 = vmatpush1.msra.mxu0 0.0
        %820 = vmatprep.subr.mxu0 0.0
        %821 = vmatpush1.msra.mxu0 0.0
        %822 = vmatprep.subr.mxu0 0.0
        %823 = vmatpush1.msra.mxu0 0.0
        %824 = vmatprep.subr.mxu0 0.0
        %825 = vmatpush1.msra.mxu0 0.0
        %826 = vmatprep.subr.mxu0 0.0
        %827 = vmatpush1.msra.mxu0 0.0
        %828 = vmatprep.subr.mxu0 0.0
        %829 = vmatpush1.msra.mxu0 0.0
        %830 = vmatprep.subr.mxu0 0.0
        %831 = vmatpush1.msra.mxu0 0.0
        %832 = vmatprep.subr.mxu0 0.0
        %833 = vmatpush1.msra.mxu0 0.0
        %834 = vmatprep.subr.mxu0 0.0
        %835 = vmatpush1.msra.mxu0 0.0
        %836 = vmatprep.subr.mxu0 0.0
        %837 = vmatpush1.msra.mxu0 0.0
        %838 = vmatprep.subr.mxu0 0.0
        %839 = vmatpush1.msra.mxu0 0.0
        %840 = vmatprep.subr.mxu0 0.0
        %841 = vmatpush1.msra.mxu0 0.0
        %842 = vmatprep.subr.mxu0 0.0
        %843 = vmatpush1.msra.mxu0 0.0
        %844 = vmatprep.subr.mxu0 0.0
        %845 = vmatpush1.msra.mxu0 0.0
        %846 = vmatprep.subr.mxu0 0.0
        %847 = vmatpush1.msra.mxu0 0.0
        %848 = vmatprep.subr.mxu0 0.0
        %849 = vmatpush1.msra.mxu0 0.0
        %850 = vmatprep.subr.mxu0 0.0
        %851 = vmatpush1.msra.mxu0 0.0
        %852 = vmatprep.subr.mxu0 0.0
        %853 = vmatpush1.msra.mxu0 0.0
        %854 = vmatprep.subr.mxu0 0.0
        %855 = vmatpush1.msra.mxu0 0.0
        %856 = vmatprep.subr.mxu0 0.0
        %857 = vmatpush1.msra.mxu0 0.0
        %858 = vmatprep.mubr.f32.mxu0 0.0
        %859 = vmatmul.mubr.f32.gmra.mrb[0].mxu0 %v792
        %v860 = vpop.f32.mrb[0].mxu0
        %v861 = vadd.f32 0.0, %v860
        %v862 = vpop.f32.mrb[0].mxu0
        %863 = vdwg.mxu0
        %865 = vrot.lane.b32.xlu0 %v861, 16
        %v866 = vpop.permute.xlu0 %865
        %vm868 = vcmask 195712
        %869 = vst.msk [vmem:[#allocation2] sm:$0xff] %vm868, %v866
        %870 = vrot.lane.b32.xlu0 %v360, 104
        %v871 = vpop.permute.xlu0 %870
        %872 = vrot.lane.b32.xlu0 %v354, 72
        %v873 = vpop.permute.xlu0 %872
        %v874 = vsel %vm364, %v871, 0
        %v876 = vsel %vm364, %v873, 0
        %878 = vmatprep.subr.mxu0 0.0
        %879 = vmatpush1.xpose.msra.mxu0 %v876
        %880 = vmatprep.subr.mxu0 0.0
        %881 = vmatpush1.xpose.msra.mxu0 0.0
        %882 = vmatprep.subr.mxu0 0.0
        %883 = vmatpush1.xpose.msra.mxu0 0.0
        %884 = vmatprep.subr.mxu0 0.0
        %885 = vmatpush1.xpose.msra.mxu0 0.0
        %886 = vmatprep.subr.mxu0 0.0
        %887 = vmatpush1.xpose.msra.mxu0 0.0
        %888 = vmatprep.subr.mxu0 0.0
        %889 = vmatpush1.xpose.msra.mxu0 0.0
        %890 = vmatprep.subr.mxu0 0.0
        %891 = vmatpush1.xpose.msra.mxu0 0.0
        %892 = vmatprep.subr.mxu0 0.0
        %893 = vmatpush1.xpose.msra.mxu0 0.0
        %894 = vmatprep.subr.mxu0 0.0
        %895 = vmatpush1.xpose.msra.mxu0 0.0
        %896 = vmatprep.subr.mxu0 0.0
        %897 = vmatpush1.xpose.msra.mxu0 0.0
        %898 = vmatprep.subr.mxu0 0.0
        %899 = vmatpush1.xpose.msra.mxu0 0.0
        %900 = vmatprep.subr.mxu0 0.0
        %901 = vmatpush1.xpose.msra.mxu0 0.0
        %902 = vmatprep.subr.mxu0 0.0
        %903 = vmatpush1.xpose.msra.mxu0 0.0
        %904 = vmatprep.subr.mxu0 0.0
        %905 = vmatpush1.xpose.msra.mxu0 0.0
        %906 = vmatprep.subr.mxu0 0.0
        %907 = vmatpush1.xpose.msra.mxu0 0.0
        %908 = vmatprep.subr.mxu0 0.0
        %909 = vmatpush1.xpose.msra.mxu0 0.0
        %910 = vmatprep.subr.mxu0 0.0
        %911 = vmatpush1.xpose.msra.mxu0 0.0
        %912 = vmatprep.subr.mxu0 0.0
        %913 = vmatpush1.xpose.msra.mxu0 0.0
        %914 = vmatprep.subr.mxu0 0.0
        %915 = vmatpush1.xpose.msra.mxu0 0.0
        %916 = vmatprep.subr.mxu0 0.0
        %917 = vmatpush1.xpose.msra.mxu0 0.0
        %918 = vmatprep.subr.mxu0 0.0
        %919 = vmatpush1.xpose.msra.mxu0 0.0
        %920 = vmatprep.subr.mxu0 0.0
        %921 = vmatpush1.xpose.msra.mxu0 0.0
        %922 = vmatprep.subr.mxu0 0.0
        %923 = vmatpush1.xpose.msra.mxu0 0.0
        %924 = vmatprep.subr.mxu0 0.0
        %925 = vmatpush1.xpose.msra.mxu0 0.0
        %926 = vmatprep.subr.mxu0 0.0
        %927 = vmatpush1.xpose.msra.mxu0 0.0
        %928 = vmatprep.subr.mxu0 0.0
        %929 = vmatpush1.xpose.msra.mxu0 0.0
        %930 = vmatprep.subr.mxu0 0.0
        %931 = vmatpush1.xpose.msra.mxu0 0.0
        %932 = vmatprep.subr.mxu0 0.0
        %933 = vmatpush1.xpose.msra.mxu0 0.0
        %934 = vmatprep.subr.mxu0 0.0
        %935 = vmatpush1.xpose.msra.mxu0 0.0
        %936 = vmatprep.subr.mxu0 0.0
        %937 = vmatpush1.xpose.msra.mxu0 0.0
        %938 = vmatprep.subr.mxu0 0.0
        %939 = vmatpush1.xpose.msra.mxu0 0.0
        %940 = vmatprep.subr.mxu0 0.0
        %941 = vmatpush1.xpose.msra.mxu0 0.0
        %942 = vmatprep.mubr.f32.mxu0 0.0
        %943 = vmatmul.mubr.f32.gmra.mrb[0].mxu0 %v874
        %v944 = vpop.f32.mrb[0].mxu0
        %v945 = vadd.f32 0.0, %v944
        %v946 = vpop.f32.mrb[0].mxu0
        %947 = vdwg.mxu0
        %v948 = vsel %vm364, %v945, -inf
        %949 = vmax.xlane.f32.xlu0 %v948
        %v950 = vpop.xlane.xlu0 %949
        %v951 = vsub.f32 %v945, %v950
        %v952 = vmul.f32 %v951, 1.442695
        %v953 = vpow.pop %v952
        %v954 = vsel %vm364, %v953, 0.0
        %955 = vadd.xlane.f32.xlu0 %v954
        %v956 = vpop.xlane.xlu0 %955
        %v957 = vrcp.pop %v956
        %v958 = vmul.f32 %v953, %v957
        %959 = vrot.lane.b32.xlu0 %v354, 40
        %v960 = vpop.permute.xlu0 %959
        %v963 = vsel %vm364, %v958, 0
        %965 = vmatprep.subr.mxu0 0.0
        %966 = vmatpush1.msra.mxu0 %v960
        %967 = vmatprep.subr.mxu0 0.0
        %968 = vmatpush1.msra.mxu0 0.0
        %969 = vmatprep.subr.mxu0 0.0
        %970 = vmatpush1.msra.mxu0 0.0
        %971 = vmatprep.subr.mxu0 0.0
        %972 = vmatpush1.msra.mxu0 0.0
        %973 = vmatprep.subr.mxu0 0.0
        %974 = vmatpush1.msra.mxu0 0.0
        %975 = vmatprep.subr.mxu0 0.0
        %976 = vmatpush1.msra.mxu0 0.0
        %977 = vmatprep.subr.mxu0 0.0
        %978 = vmatpush1.msra.mxu0 0.0
        %979 = vmatprep.subr.mxu0 0.0
        %980 = vmatpush1.msra.mxu0 0.0
        %981 = vmatprep.subr.mxu0 0.0
        %982 = vmatpush1.msra.mxu0 0.0
        %983 = vmatprep.subr.mxu0 0.0
        %984 = vmatpush1.msra.mxu0 0.0
        %985 = vmatprep.subr.mxu0 0.0
        %986 = vmatpush1.msra.mxu0 0.0
        %987 = vmatprep.subr.mxu0 0.0
        %988 = vmatpush1.msra.mxu0 0.0
        %989 = vmatprep.subr.mxu0 0.0
        %990 = vmatpush1.msra.mxu0 0.0
        %991 = vmatprep.subr.mxu0 0.0
        %992 = vmatpush1.msra.mxu0 0.0
        %993 = vmatprep.subr.mxu0 0.0
        %994 = vmatpush1.msra.mxu0 0.0
        %995 = vmatprep.subr.mxu0 0.0
        %996 = vmatpush1.msra.mxu0 0.0
        %997 = vmatprep.subr.mxu0 0.0
        %998 = vmatpush1.msra.mxu0 0.0
        %999 = vmatprep.subr.mxu0 0.0
        %1000 = vmatpush1.msra.mxu0 0.0
        %1001 = vmatprep.subr.mxu0 0.0
        %1002 = vmatpush1.msra.mxu0 0.0
        %1003 = vmatprep.subr.mxu0 0.0
        %1004 = vmatpush1.msra.mxu0 0.0
        %1005 = vmatprep.subr.mxu0 0.0
        %1006 = vmatpush1.msra.mxu0 0.0
        %1007 = vmatprep.subr.mxu0 0.0
        %1008 = vmatpush1.msra.mxu0 0.0
        %1009 = vmatprep.subr.mxu0 0.0
        %1010 = vmatpush1.msra.mxu0 0.0
        %1011 = vmatprep.subr.mxu0 0.0
        %1012 = vmatpush1.msra.mxu0 0.0
        %1013 = vmatprep.subr.mxu0 0.0
        %1014 = vmatpush1.msra.mxu0 0.0
        %1015 = vmatprep.subr.mxu0 0.0
        %1016 = vmatpush1.msra.mxu0 0.0
        %1017 = vmatprep.subr.mxu0 0.0
        %1018 = vmatpush1.msra.mxu0 0.0
        %1019 = vmatprep.subr.mxu0 0.0
        %1020 = vmatpush1.msra.mxu0 0.0
        %1021 = vmatprep.subr.mxu0 0.0
        %1022 = vmatpush1.msra.mxu0 0.0
        %1023 = vmatprep.subr.mxu0 0.0
        %1024 = vmatpush1.msra.mxu0 0.0
        %1025 = vmatprep.subr.mxu0 0.0
        %1026 = vmatpush1.msra.mxu0 0.0
        %1027 = vmatprep.subr.mxu0 0.0
        %1028 = vmatpush1.msra.mxu0 0.0
        %1029 = vmatprep.mubr.f32.mxu0 0.0
        %1030 = vmatmul.mubr.f32.gmra.mrb[0].mxu0 %v963
        %v1031 = vpop.f32.mrb[0].mxu0
        %v1032 = vadd.f32 0.0, %v1031
        %v1033 = vpop.f32.mrb[0].mxu0
        %1034 = vdwg.mxu0
        %1036 = vrot.lane.b32.xlu0 %v1032, 24
        %v1037 = vpop.permute.xlu0 %1036
        %vm1039 = vcmask 261312
        %1040 = vst.msk [vmem:[#allocation2] sm:$0xff] %vm1039, %v1037
        %v1041 = vld [vmem:[#allocation2] sm:$0xff]
        %v1042 = vpack.c.bf16 %v1041, %v1041
        %v1043 = vld [vmem:[%s3] sm:$0xf]
        %v1044 = vld [vmem:[%s3 + $0x4] sm:$0xf]
        %v1045 = vld [vmem:[%s3 + $0x8] sm:$0xf]
        %v1046 = vld [vmem:[%s3 + $0xc] sm:$0xf]
        %v1048 = vlaneseq
        %v1049 = vshrl.u32 %v1048, 7
        %v1050 = vsub.s32 0, %v1049
        %v1051 = vrot.slane %v359, %v1050
        %v1057 = vunpack.c.l.b16 %v1043
        %v1058 = vunpack.c.l.b16 %v1044
        %v1059 = vunpack.c.l.b16 %v1045
        %v1060 = vunpack.c.l.b16 %v1046
        %v1061 = vpack.c.b16 %v1058, %v1057
        %v1062 = vpack.c.b16 %v1060, %v1059
        %v1066 = vsel %vm315, %v1042, 0
        %1068 = vmatprep.subr.bf16.mxu0 0
        %1069 = vmatpush1.bf16.msra.mxu0 %v1061
        %1070 = vmatprep.subr.bf16.mxu0 0
        %1071 = vmatpush1.bf16.msra.mxu0 %v1062
        %1072 = vmatprep.subr.bf16.mxu0 0
        %1073 = vmatpush1.bf16.msra.mxu0 0
        %1074 = vmatprep.subr.bf16.mxu0 0
        %1075 = vmatpush1.bf16.msra.mxu0 0
        %1076 = vmatprep.subr.bf16.mxu0 0
        %1077 = vmatpush1.bf16.msra.mxu0 0
        %1078 = vmatprep.subr.bf16.mxu0 0
        %1079 = vmatpush1.bf16.msra.mxu0 0
        %1080 = vmatprep.subr.bf16.mxu0 0
        %1081 = vmatpush1.bf16.msra.mxu0 0
        %1082 = vmatprep.subr.bf16.mxu0 0
        %1083 = vmatpush1.bf16.msra.mxu0 0
        %1084 = vmatprep.subr.bf16.mxu0 0
        %1085 = vmatpush1.bf16.msra.mxu0 0
        %1086 = vmatprep.subr.bf16.mxu0 0
        %1087 = vmatpush1.bf16.msra.mxu0 0
        %1088 = vmatprep.subr.bf16.mxu0 0
        %1089 = vmatpush1.bf16.msra.mxu0 0
        %1090 = vmatprep.subr.bf16.mxu0 0
        %1091 = vmatpush1.bf16.msra.mxu0 0
        %1092 = vmatprep.subr.bf16.mxu0 0
        %1093 = vmatpush1.bf16.msra.mxu0 0
        %1094 = vmatprep.subr.bf16.mxu0 0
        %1095 = vmatpush1.bf16.msra.mxu0 0
        %1096 = vmatprep.subr.bf16.mxu0 0
        %1097 = vmatpush1.bf16.msra.mxu0 0
        %1098 = vmatprep.subr.bf16.mxu0 0
        %1099 = vmatpush1.bf16.msra.mxu0 0
        %1100 = vmatprep.mubr.bf16.mxu0 0
        %1101 = vmatmul.mubr.bf16.gmra.mrb[0].mxu0 %v1066
        %v1102 = vpop.f32.mrb[0].mxu0
        %v1103 = vadd.f32 %v1051, %v1102
        %v1104 = vpop.f32.mrb[0].mxu0
        %v1105 = vpop.f32.mrb[0].mxu0
        %v1106 = vpop.f32.mrb[0].mxu0
        %1107 = vdwg.mxu0
        %v1108 = vadd.f32 %v290, %v1103
        %v1109 = vpack.c.bf16 %v1108, %v1108
        %v1110 = vld [vmem:[%s4] sm:$0xf]
        %v1111 = vld [vmem:[%s4 + $0x4] sm:$0xf]
        %v1112 = vld [vmem:[%s4 + $0x8] sm:$0xf]
        %v1113 = vld [vmem:[%s4 + $0xc] sm:$0xf]
        %v1118 = vunpack.c.l.b16 %v1110
        %v1119 = vunpack.c.l.b16 %v1111
        %v1120 = vunpack.c.l.b16 %v1112
        %v1121 = vunpack.c.l.b16 %v1113
        %v1122 = vpack.c.b16 %v1119, %v1118
        %v1123 = vpack.c.b16 %v1121, %v1120
        %1126 = vrot.lane.b32.xlu0 %v1051, 96
        %v1127 = vpop.permute.xlu0 %1126
        %v1130 = vsel %vm315, %v1109, 0
        %1132 = vmatprep.subr.bf16.mxu0 0
        %1133 = vmatpush1.bf16.msra.mxu0 %v1122
        %1134 = vmatprep.subr.bf16.mxu0 0
        %1135 = vmatpush1.bf16.msra.mxu0 %v1123
        %1136 = vmatprep.subr.bf16.mxu0 0
        %1137 = vmatpush1.bf16.msra.mxu0 0
        %1138 = vmatprep.subr.bf16.mxu0 0
        %1139 = vmatpush1.bf16.msra.mxu0 0
        %1140 = vmatprep.subr.bf16.mxu0 0
        %1141 = vmatpush1.bf16.msra.mxu0 0
        %1142 = vmatprep.subr.bf16.mxu0 0
        %1143 = vmatpush1.bf16.msra.mxu0 0
        %1144 = vmatprep.subr.bf16.mxu0 0
        %1145 = vmatpush1.bf16.msra.mxu0 0
        %1146 = vmatprep.subr.bf16.mxu0 0
        %1147 = vmatpush1.bf16.msra.mxu0 0
        %1148 = vmatprep.subr.bf16.mxu0 0
        %1149 = vmatpush1.bf16.msra.mxu0 0
        %1150 = vmatprep.subr.bf16.mxu0 0
        %1151 = vmatpush1.bf16.msra.mxu0 0
        %1152 = vmatprep.subr.bf16.mxu0 0
        %1153 = vmatpush1.bf16.msra.mxu0 0
        %1154 = vmatprep.subr.bf16.mxu0 0
        %1155 = vmatpush1.bf16.msra.mxu0 0
        %1156 = vmatprep.subr.bf16.mxu0 0
        %1157 = vmatpush1.bf16.msra.mxu0 0
        %1158 = vmatprep.subr.bf16.mxu0 0
        %1159 = vmatpush1.bf16.msra.mxu0 0
        %1160 = vmatprep.subr.bf16.mxu0 0
        %1161 = vmatpush1.bf16.msra.mxu0 0
        %1162 = vmatprep.subr.bf16.mxu0 0
        %1163 = vmatpush1.bf16.msra.mxu0 0
        %1164 = vmatprep.mubr.bf16.mxu0 0
        %1165 = vmatmul.mubr.bf16.gmra.mrb[0].mxu0 %v1130
        %v1166 = vpop.f32.mrb[0].mxu0
        %v1167 = vadd.f32 %v1127, %v1166
        %v1168 = vpop.f32.mrb[0].mxu0
        %v1169 = vpop.f32.mrb[0].mxu0
        %v1170 = vpop.f32.mrb[0].mxu0
        %1171 = vdwg.mxu0
        %v1172 = vpack.c.bf16 %v1167, %v1167
        %v1173 = vld [vmem:[%s5] sm:$0xf]
        %v1174 = vld [vmem:[%s5 + $0x4] sm:$0xf]
        %v1177 = vunpack.c.l.b16 %v1173
        %v1178 = vunpack.c.l.b16 %v1174
        %v1179 = vpack.c.b16 %v1178, %v1177
        %1181 = vrot.lane.b32.xlu0 %v1051, 80
        %v1182 = vpop.permute.xlu0 %1181
        %vm1184 = vcmask 130048
        %v1186 = vsel %vm1184, %v1172, 0
        %1188 = vmatprep.subr.bf16.mxu0 0
        %1189 = vmatpush1.bf16.msra.mxu0 %v1179
        %1190 = vmatprep.subr.bf16.mxu0 0
        %1191 = vmatpush1.bf16.msra.mxu0 0
        %1192 = vmatprep.subr.bf16.mxu0 0
        %1193 = vmatpush1.bf16.msra.mxu0 0
        %1194 = vmatprep.subr.bf16.mxu0 0
        %1195 = vmatpush1.bf16.msra.mxu0 0
        %1196 = vmatprep.subr.bf16.mxu0 0
        %1197 = vmatpush1.bf16.msra.mxu0 0
        %1198 = vmatprep.subr.bf16.mxu0 0
        %1199 = vmatpush1.bf16.msra.mxu0 0
        %1200 = vmatprep.subr.bf16.mxu0 0
        %1201 = vmatpush1.bf16.msra.mxu0 0
        %1202 = vmatprep.subr.bf16.mxu0 0
        %1203 = vmatpush1.bf16.msra.mxu0 0
        %1204 = vmatprep.subr.bf16.mxu0 0
        %1205 = vmatpush1.bf16.msra.mxu0 0
        %1206 = vmatprep.subr.bf16.mxu0 0
        %1207 = vmatpush1.bf16.msra.mxu0 0
        %1208 = vmatprep.subr.bf16.mxu0 0
        %1209 = vmatpush1.bf16.msra.mxu0 0
        %1210 = vmatprep.subr.bf16.mxu0 0
        %1211 = vmatpush1.bf16.msra.mxu0 0
        %1212 = vmatprep.subr.bf16.mxu0 0
        %1213 = vmatpush1.bf16.msra.mxu0 0
        %1214 = vmatprep.subr.bf16.mxu0 0
        %1215 = vmatpush1.bf16.msra.mxu0 0
        %1216 = vmatprep.subr.bf16.mxu0 0
        %1217 = vmatpush1.bf16.msra.mxu0 0
        %1218 = vmatprep.subr.bf16.mxu0 0
        %1219 = vmatpush1.bf16.msra.mxu0 0
        %1220 = vmatprep.mubr.bf16.mxu0 0
        %1221 = vmatmul.mubr.bf16.gmra.mrb[0].mxu0 %v1186
        %v1222 = vpop.f32.mrb[0].mxu0
        %v1223 = vadd.f32 %v1182, %v1222
        %v1224 = vpop.f32.mrb[0].mxu0
        %v1225 = vpop.f32.mrb[0].mxu0
        %v1226 = vpop.f32.mrb[0].mxu0
        %1227 = vdwg.mxu0
        %v1228 = vadd.f32 %v1108, %v1223
        %1229 = vst.msk [vmem:[%s284] sm:$0xff] %vm315, %v1228
        %s1230 = sand.u32 %s182, 1
        %s1231 = scalar_lea.sflag [#allocation5], %s1230
        %s1232 = sand.u32 %s182, 1
        %s1233 = smul.addr %s1232, 8
        %s1234 = scalar_lea.vmem [#allocation6], %s1233
        // Predicated region
        $region53: #{tpu_custom_call.1} parent=47 // pred_check
          %p1235 = pneg %p192
        $region54: #{tpu_custom_call.1} parent=47 // pred_check_branch
          %1237 = sbr.rel (%p1235) target = $region56
        $region55: #{tpu_custom_call.1} parent=47 // pred_region
          %s1239 = ssub.s32 128, 128
          %1240 = vsyncadd %s1231, %s1239
          %s1241 = smul.addr %s22, 128
          %s1242 = scalar_lea.hbm %s7, %s1241
          %s1244 = sshll.u32 %s1234, 4
          %s1245 = int_to_ptr.vmem [resolvable:$true] %s1244
          %1247 = dma.vmem_to_hbm [thread:$0]  %s1245, 128, %s1242, %s1231
        $region56: #{tpu_custom_call.1} parent=47 // pred_fallthru
          _
      $region48: #{tpu_custom_call.1} parent=5 // pred_fallthru
        _
      %p1248 = scmp.le.s32.totalorder 2, %s17
      // Predicated region
      $region57: #{tpu_custom_call.1} parent=5 // pred_check
        %p1249 = pneg %p1248
      $region58: #{tpu_custom_call.1} parent=5 // pred_check_branch
        %1251 = sbr.rel (%p1249) target = $region60
      $region59: #{tpu_custom_call.1} parent=5 // pred_region
        %s1252 = ssub.s32 %s17, 2
        // Predicated region
        $region61: #{tpu_custom_call.1} parent=59 // pred_check
          %p1253 = pneg %p198
        $region62: #{tpu_custom_call.1} parent=59 // pred_check_branch
          %1255 = sbr.rel (%p1253) target = $region64
        $region63: #{tpu_custom_call.1} parent=59 // pred_region
          %s1256 = sand.u32 %s183, 1
          %s1257 = scalar_lea.sflag [#allocation5], %s1256
          %s1258 = sand.u32 %s183, 1
          %s1259 = smul.addr %s1258, 8
          %s1260 = scalar_lea.vmem [#allocation6], %s1259
          %1261 = dma.done %s1257, 128
        $region64: #{tpu_custom_call.1} parent=59 // pred_fallthru
          _
      $region60: #{tpu_custom_call.1} parent=5 // pred_fallthru
        _
    $region6: #{tpu_custom_call.1} parent=1 // loop_footer
      %s21 = sadd.s32 1, %s17
    $region7: #{tpu_custom_call.1} parent=1 // loop_footer_branch
      %16 = sbr.rel target = $region3
    $region8: #{tpu_custom_call.1} parent=1 // loop_exit
      _
    %1262 = vsyncpa [#allocation4], 1
    %s1263 = scalar_lea.sflag [#allocation4], 1
    %1264 = vsyncpa %s1263, 1
    %1265 = vsyncpa [#allocation5], 1
    %s1266 = scalar_lea.sflag [#allocation5], 1
    %1267 = vsyncpa %s1266, 1

</llo_original>
